<compile_context>
chip_gen: v7x
topology: tpu7x:2x2x1
jax: 0.10.0
libtpu: 0.0.40
codegen_flags: <defaults>
</compile_context>

<pallas_src>
import jax
import jax.numpy as jnp
from jax.experimental import pallas as pl
from jax.experimental.pallas import tpu as pltpu


def _round_up(x: int, m: int) -> int:
    return (x + m - 1) // m * m


def _classifier_kernel(x_ref, af_ref, w2x_ref, w_af_ref, b2_ref, w3_ref,
                       out_ref):
    # bf16 MXU operands (no-op if inputs already bf16), f32 accumulation.
    x_bf = x_ref[...].astype(jnp.bfloat16)
    af_bf = af_ref[...].astype(jnp.bfloat16)

    # pre = x @ w2x + af @ W_af + b2_fused   (two independent MXU pushes)
    pre = (jnp.dot(x_bf, w2x_ref[...], preferred_element_type=jnp.float32)
           + jnp.dot(af_bf, w_af_ref[...], preferred_element_type=jnp.float32)
           + b2_ref[...])

    # tanh on the bf16 path (halves VPU/EUP element count on v6e/v7x); the
    # result is already the bf16 operand the final matmul wants.
    h = jnp.tanh(pre.astype(jnp.bfloat16))

    # Final Linear(C -> N_pad), no bias; zero-padded columns give exact zeros.
    out_ref[...] = jnp.dot(h, w3_ref[...], preferred_element_type=jnp.float32)


def init_params(key, block_channels, additional_feature_dim, num_classes=2):
    """Natural (PyTorch-shaped) f32 parameters."""
    k1, k2, k3, k4, k5 = jax.random.split(key, 5)
    scale = 0.02
    return {
        # Linear(additional_feature_dim -> block_channels)
        "w1": scale * jax.random.normal(
            k1, (additional_feature_dim, block_channels), jnp.float32),
        "b1": scale * jax.random.normal(k2, (block_channels,), jnp.float32),
        # Linear(2*block_channels -> block_channels)
        "w2": scale * jax.random.normal(
            k3, (2 * block_channels, block_channels), jnp.float32),
        "b2": scale * jax.random.normal(k4, (block_channels,), jnp.float32),
        # Linear(block_channels -> num_classes, bias=False)
        "w3": scale * jax.random.normal(
            k5, (block_channels, num_classes), jnp.float32),
    }


def prepare_params(params):
    """One-time prep: fold the af branch into one matmul, cast/pad weights."""
    w1, b1, w2, b2, w3 = (params["w1"], params["b1"], params["w2"],
                          params["b2"], params["w3"])
    A, C = w1.shape
    num_classes = w3.shape[1]
    N_pad = _round_up(max(num_classes, 128), 128)   # lane-dense output stores

    w2x = w2[:C, :]                                 # x half of the concat
    w2a = w2[C:, :]                                 # af half of the concat
    w_af = w1 @ w2a                                 # (A, C), exact fusion in f32
    b2_fused = b2 + b1 @ w2a                        # (C,),   exact fusion in f32

    w3_p = jnp.zeros((C, N_pad), jnp.bfloat16).at[:, :num_classes].set(
        w3.astype(jnp.bfloat16))
    return {
        "w2x": w2x.astype(jnp.bfloat16),            # (C, C)
        "w_af": w_af.astype(jnp.bfloat16),          # (A, C) — native A, no pad
        "b2": b2_fused.reshape(1, C).astype(jnp.float32),
        "w3": w3_p,                                 # (C, N_pad)
    }


def custom_classifier(x, additional_feature, prepared, *, num_classes,
                      tile_b=128):
    """x: (B, C), additional_feature: (B, A) -> (B, num_classes) f32.

    Inputs may be f32 or bf16. tile_b: batch rows per grid step (rounded to a
    multiple of 8). 128 is the portable default (feeds both v7x TCs when
    B >= 256); on single-TC v5e/v6e use tile_b >= B to get a 1-step grid.
    """
    B, C = x.shape
    A = additional_feature.shape[1]
    N_pad = prepared["w3"].shape[1]

    tb = _round_up(min(tile_b, _round_up(B, 8)), 8)
    B_pad = _round_up(B, tb)

    x_p, af_p = x, additional_feature
    if B_pad != B:
        # Padded rows produce garbage that is sliced off below — keep the [:B].
        x_p = jnp.zeros((B_pad, C), x.dtype).at[:B, :].set(x)
        af_p = jnp.zeros((B_pad, A), additional_feature.dtype
                         ).at[:B, :].set(additional_feature)

    grid = (B_pad // tb,)

    # Weights/biases: same block every step -> kept VMEM-resident.
    def resident(a):
        return pl.BlockSpec(a.shape, lambda i: (0, 0))

    weight_bytes = sum(int(prepared[k].size) * prepared[k].dtype.itemsize
                       for k in ("w2x", "w_af", "b2", "w3"))
    bytes_accessed = (int(x_p.size) * x_p.dtype.itemsize
                      + int(af_p.size) * af_p.dtype.itemsize
                      + weight_bytes
                      + B_pad * N_pad * 4)
    cost = pl.CostEstimate(
        flops=2 * B_pad * (C * C + A * C + C * N_pad),
        transcendentals=B_pad * C,
        bytes_accessed=bytes_accessed)

    out = pl.pallas_call(
        _classifier_kernel,
        out_shape=jax.ShapeDtypeStruct((B_pad, N_pad), jnp.float32),
        grid=grid,
        in_specs=[
            pl.BlockSpec((tb, C), lambda i: (i, 0)),   # x tile
            pl.BlockSpec((tb, A), lambda i: (i, 0)),   # af tile, native width
            resident(prepared["w2x"]),
            resident(prepared["w_af"]),
            resident(prepared["b2"]),
            resident(prepared["w3"]),
        ],
        out_specs=pl.BlockSpec((tb, N_pad), lambda i: (i, 0)),
        compiler_params=pltpu.CompilerParams(
            dimension_semantics=("parallel",)),        # dual-TC sharding on v7x
        cost_estimate=cost,
    )(x_p, af_p, prepared["w2x"], prepared["w_af"], prepared["b2"],
      prepared["w3"])

    return out[:B, :num_classes]


def reference(x, af, p):
    af_t = af @ p["w1"] + p["b1"]
    h = jnp.tanh(jnp.concatenate([x, af_t], axis=1) @ p["w2"] + p["b2"])
    return h @ p["w3"]


if __name__ == "__main__":
    # maxvit_t head: classifier[3].in_features == 512 channels.
    B = 32
    block_channels = 512
    additional_feature_dim = 156
    num_classes = 2

    key = jax.random.PRNGKey(0)
    kx, ka, kp = jax.random.split(key, 3)
    x = jax.random.normal(kx, (B, block_channels), jnp.float32)
    additional_feature = jax.random.normal(
        ka, (B, additional_feature_dim), jnp.float32)

    params = init_params(kp, block_channels, additional_feature_dim,
                         num_classes)
    prepared = prepare_params(params)   # one-time: fuse / cast / pad weights

    # tile_b=16 -> 2 grid steps at this small demo batch (exercises the
    # pipelined, parallel batch grid). Use tile_b=128 (v7x) / >=B (v5e/v6e)
    # for real batches.
    out = custom_classifier(x, additional_feature, prepared,
                            num_classes=num_classes, tile_b=16)
    out = jax.block_until_ready(out)

    ref = reference(x, additional_feature, params)
    assert out.shape == (B, num_classes), out.shape
    # bf16 matmul operands vs pure-f32 reference -> relaxed tolerance.
    assert jnp.allclose(out, ref, atol=3e-2, rtol=3e-2), \
        float(jnp.max(jnp.abs(out - ref)))

    print("KERNEL_OK")
</pallas_src>

<mosaic_0001>
module attributes {stable_mosaic.version = 11 : i64} {
  func.func @_classifier_kernel(%arg0: i32, %arg1: memref<16x512xf32, #tpu.memory_space<vmem>>, %arg2: memref<16x156xf32, #tpu.memory_space<vmem>>, %arg3: memref<512x512xbf16, #tpu.memory_space<vmem>>, %arg4: memref<156x512xbf16, #tpu.memory_space<vmem>>, %arg5: memref<1x512xf32, #tpu.memory_space<vmem>>, %arg6: memref<512x128xbf16, #tpu.memory_space<vmem>>, %arg7: memref<16x128xf32, #tpu.memory_space<vmem>>) attributes {dimension_semantics = [#tpu.dimension_semantics<parallel>], iteration_bounds = array<i64: 2>, scalar_prefetch = 0 : i64, scratch_operands = 0 : i64, tpu.core_type = #tpu.core_type<tc>, window_params = [{transform_indices = @transform_0, window_bounds = array<i64: 16, 512>}, {transform_indices = @transform_1, window_bounds = array<i64: 16, 156>}, {pipeline_mode = #tpu.pipeline_mode<synchronous>, transform_indices = @transform_2, window_bounds = array<i64: 512, 512>}, {pipeline_mode = #tpu.pipeline_mode<synchronous>, transform_indices = @transform_3, window_bounds = array<i64: 156, 512>}, {pipeline_mode = #tpu.pipeline_mode<synchronous>, transform_indices = @transform_4, window_bounds = array<i64: 1, 512>}, {pipeline_mode = #tpu.pipeline_mode<synchronous>, transform_indices = @transform_5, window_bounds = array<i64: 512, 128>}, {transform_indices = @transform_6, window_bounds = array<i64: 16, 128>}]} {
    %c0 = arith.constant 0 : index
    %c0_0 = arith.constant 0 : index
    %0 = vector.load %arg1[%c0, %c0_0] : memref<16x512xf32, #tpu.memory_space<vmem>>, vector<16x512xf32>
    %1 = arith.truncf %0 : vector<16x512xf32> to vector<16x512xbf16>
    %c0_1 = arith.constant 0 : index
    %c0_2 = arith.constant 0 : index
    %2 = vector.load %arg2[%c0_1, %c0_2] : memref<16x156xf32, #tpu.memory_space<vmem>>, vector<16x156xf32>
    %3 = arith.truncf %2 : vector<16x156xf32> to vector<16x156xbf16>
    %c0_3 = arith.constant 0 : index
    %c0_4 = arith.constant 0 : index
    %4 = vector.load %arg3[%c0_3, %c0_4] : memref<512x512xbf16, #tpu.memory_space<vmem>>, vector<512x512xbf16>
    %cst = arith.constant dense<0.000000e+00> : vector<16x512xf32>
    %5 = tpu.matmul %1, %4, %cst {dimension_numbers = #tpu.dot_dimension_numbers<[1], [0], [0], [1], [0, 0, 1, 1], [], []>} : vector<16x512xbf16>, vector<512x512xbf16>, vector<16x512xf32> -> vector<16x512xf32>
    %c0_5 = arith.constant 0 : index
    %c0_6 = arith.constant 0 : index
    %6 = vector.load %arg4[%c0_5, %c0_6] : memref<156x512xbf16, #tpu.memory_space<vmem>>, vector<156x512xbf16>
    %cst_7 = arith.constant dense<0.000000e+00> : vector<16x512xf32>
    %7 = tpu.matmul %3, %6, %cst_7 {dimension_numbers = #tpu.dot_dimension_numbers<[1], [0], [0], [1], [0, 0, 1, 1], [], []>} : vector<16x156xbf16>, vector<156x512xbf16>, vector<16x512xf32> -> vector<16x512xf32>
    %8 = arith.addf %5, %7 : vector<16x512xf32>
    %c0_8 = arith.constant 0 : index
    %c0_9 = arith.constant 0 : index
    %9 = vector.load %arg5[%c0_8, %c0_9] : memref<1x512xf32, #tpu.memory_space<vmem>>, vector<1x512xf32>
    %10 = vector.broadcast %9 : vector<1x512xf32> to vector<16x512xf32>
    %11 = arith.addf %8, %10 : vector<16x512xf32>
    %12 = arith.truncf %11 : vector<16x512xf32> to vector<16x512xbf16>
    %13 = math.tanh %12 : vector<16x512xbf16>
    %c0_10 = arith.constant 0 : index
    %c0_11 = arith.constant 0 : index
    %14 = vector.load %arg6[%c0_10, %c0_11] : memref<512x128xbf16, #tpu.memory_space<vmem>>, vector<512x128xbf16>
    %cst_12 = arith.constant dense<0.000000e+00> : vector<16x128xf32>
    %15 = tpu.matmul %13, %14, %cst_12 {dimension_numbers = #tpu.dot_dimension_numbers<[1], [0], [0], [1], [0, 0, 1, 1], [], []>} : vector<16x512xbf16>, vector<512x128xbf16>, vector<16x128xf32> -> vector<16x128xf32>
    %c0_13 = arith.constant 0 : index
    %c0_14 = arith.constant 0 : index
    %16 = vector.load %arg7[%c0_13, %c0_14] : memref<16x128xf32, #tpu.memory_space<vmem>>, vector<16x128xf32>
    tpu.vector_store %arg7[%c0_13, %c0_14], %15 {strides = array<i32>} : memref<16x128xf32, #tpu.memory_space<vmem>>, vector<16x128xf32>,
    return
  }
  func.func @transform_0(%arg0: i32) -> (i32, i32) {
    %c0_i32 = arith.constant 0 : i32
    %c0_i32_0 = arith.constant 0 : i32
    return %arg0, %c0_i32 : i32, i32
  }
  func.func @transform_1(%arg0: i32) -> (i32, i32) {
    %c0_i32 = arith.constant 0 : i32
    %c0_i32_0 = arith.constant 0 : i32
    return %arg0, %c0_i32 : i32, i32
  }
  func.func @transform_2(%arg0: i32) -> (i32, i32) {
    %c0_i32 = arith.constant 0 : i32
    %c0_i32_0 = arith.constant 0 : i32
    %c0_i32_1 = arith.constant 0 : i32
    return %c0_i32, %c0_i32_0 : i32, i32
  }
  func.func @transform_3(%arg0: i32) -> (i32, i32) {
    %c0_i32 = arith.constant 0 : i32
    %c0_i32_0 = arith.constant 0 : i32
    %c0_i32_1 = arith.constant 0 : i32
    return %c0_i32, %c0_i32_0 : i32, i32
  }
  func.func @transform_4(%arg0: i32) -> (i32, i32) {
    %c0_i32 = arith.constant 0 : i32
    %c0_i32_0 = arith.constant 0 : i32
    %c0_i32_1 = arith.constant 0 : i32
    return %c0_i32, %c0_i32_0 : i32, i32
  }
  func.func @transform_5(%arg0: i32) -> (i32, i32) {
    %c0_i32 = arith.constant 0 : i32
    %c0_i32_0 = arith.constant 0 : i32
    %c0_i32_1 = arith.constant 0 : i32
    return %c0_i32, %c0_i32_0 : i32, i32
  }
  func.func @transform_6(%arg0: i32) -> (i32, i32) {
    %c0_i32 = arith.constant 0 : i32
    %c0_i32_0 = arith.constant 0 : i32
    return %arg0, %c0_i32 : i32, i32
  }
}

</mosaic_0001>

<llo_original>
// kernel: tpu_custom_call.1
$region0: #{tpu_custom_call.1}
  #allocation0 [shape = 'u32[]', space=smem, size = 0x4, offset = 0x4, fixed_abs, tag = 'smem constant byte address 0x4 - core index']
  #allocation1 [shape = 'u32[144,128]{1,0:T(1,128)}', space=vmem, size = 0x12000, scoped, tag = 'internal scratch']
  %s0 = inlined_call_operand.hbm [shape: f32[32,512], index: 0, kind: input, shape index: {}]
  %s1 = inlined_call_operand.hbm [shape: f32[32,156], index: 1, kind: input, shape index: {}]
  %s2 = inlined_call_operand.hbm [shape: bf16[512,512], index: 2, kind: input, shape index: {}]
  %s3 = inlined_call_operand.hbm [shape: bf16[156,512], index: 3, kind: input, shape index: {}]
  %s4 = inlined_call_operand.vmem [shape: f32[1,512], index: 4, kind: input, shape index: {}]
  %s5 = inlined_call_operand.hbm [shape: bf16[512,128], index: 5, kind: input, shape index: {}]
  %s6 = inlined_call_operand.hbm [shape: f32[32,128], index: 6, kind: output, shape index: {}]
  %s7 = sld [smem:[#allocation0]]
  $region77: #{tpu_custom_call.1} parent=0
    _
  %s9 = ssub.s32 1, %s7
  %s10 = scalar_select 0, %s9, %s7
  $region1: #{tpu_custom_call.1} parent=0
    #allocation2 [shape = 'u8[65536]{0}', space=vmem, size = 0x10000, scoped, tag = 'input window, operand 0']
    #allocation3 [shape = 's32[2]{0}', space=sflag, size = 0x8, scoped, tag = 'scoped memory for tpu_custom_call.1']
    #allocation4 [shape = 's32[2]{0}', space=sflag, size = 0x8, scoped, tag = 'scoped memory for tpu_custom_call.1']
    #allocation5 [shape = 'u8[32768]{0}', space=vmem, size = 0x8000, scoped, tag = 'input window, operand 1']
    #allocation6 [shape = 's32[2]{0}', space=sflag, size = 0x8, scoped, tag = 'scoped memory for tpu_custom_call.1']
    #allocation7 [shape = 'u8[524288]{0}', space=vmem, size = 0x80000, scoped, tag = 'input window, operand 2, single buffered']
    #allocation8 [shape = 'u8[163840]{0}', space=vmem, size = 0x28000, scoped, tag = 'input window, operand 3, single buffered']
    #allocation9 [shape = 's32[1]{0}', space=sflag, size = 0x4, scoped, tag = 'scoped memory for tpu_custom_call.1']
    #allocation10 [shape = 'u8[131072]{0}', space=vmem, size = 0x20000, scoped, tag = 'input window, operand 5, single buffered']
    #allocation11 [shape = 'u8[16384]{0}', space=vmem, size = 0x4000, scoped, tag = 'output window, operand 0']
    %11 = vsyncpa [#allocation3], 0
    %s12 = scalar_lea.sflag [#allocation3], 1
    %13 = vsyncpa %s12, 0
    %14 = vsyncpa [#allocation6], 0
    %s15 = scalar_lea.sflag [#allocation6], 1
    %16 = vsyncpa %s15, 0
    %17 = vsyncpa [#allocation9], 0
    %18 = vsyncpa [#allocation4], 0
    %s19 = scalar_lea.sflag [#allocation4], 1
    %20 = vsyncpa %s19, 0
    loop: start=0, step=1, limit=4
    $region2: #{tpu_custom_call.1} parent=1 // loop_pre_header
      _
    $region3: #{tpu_custom_call.1} parent=1 // loop_header
      %s22 = sphi 0, %s26
      %p23 = scmp.ge.s32.totalorder %s22, 4
      %s32 = sphi 0, %s34
      %s35 = sphi 0, %s32
      %s36 = sphi 0, %s35
      %s52 = sphi 0, %s36
      %s58 = sphi 0, %s60
      %s61 = sphi 0, %s58
      %s62 = sphi 0, %s61
      %s78 = sphi 0, %s62
      %s82 = sphi 0, %s82
      %s84 = sphi 0, %s82
      %s85 = sphi 0, %s84
      %s99 = sphi 0, %s85
      %s103 = sphi 0, %s103
      %s105 = sphi 0, %s103
      %s106 = sphi 0, %s105
      %s120 = sphi 0, %s106
      %s124 = sphi 0, %s124
      %s126 = sphi 0, %s124
      %s127 = sphi 0, %s126
      %s141 = sphi 0, %s127
      %s145 = sphi 0, %s145
      %s147 = sphi 0, %s145
      %s148 = sphi 0, %s147
      %s162 = sphi 0, %s148
      %s168 = sphi 0, %s170
      %s171 = sphi 0, %s168
      %s172 = sphi 0, %s171
      %s188 = sphi 0, %s172
    $region4: #{tpu_custom_call.1} parent=1 // loop_header_branch
      %25 = sbr.rel (%p23) target = $region8
    $region5: #{tpu_custom_call.1} parent=1 // loop_body
      %s27 = ssub.s32 %s22, 1
      %s28 = ssub.s32 %s22, 2
      %s29 = sadd.s32 %s22, 1
      %s30 = ssub.s32 %s22, %s29
      %p31 = scmp.eq.s32.totalorder %s30, 0
      %s33 = sadd.s32 %s32, 1
      %s34 = scalar_select %p31, %s32, %s33
      %p37 = pneg %p31
      %p38 = scmp.eq.s32.totalorder %s22, 1
      %p39 = por %p37, %p38
      %p40 = scmp.ne.s32.totalorder %s32, %s35
      %p41 = scmp.eq.s32.totalorder %s22, 0
      %p42 = por %p40, %p41
      %p43 = scmp.ne.s32.totalorder %s32, %s35
      %p44 = scmp.eq.s32.totalorder %s27, 1
      %p45 = por %p43, %p44
      %p46 = scmp.ne.s32.totalorder %s35, %s36
      %p47 = scmp.eq.s32.totalorder %s27, 0
      %p48 = por %p46, %p47
      %p49 = scmp.ne.s32.totalorder %s35, %s36
      %p50 = scmp.eq.s32.totalorder %s28, 1
      %p51 = por %p49, %p50
      %p53 = scmp.ne.s32.totalorder %s36, %s52
      %p54 = scmp.eq.s32.totalorder %s28, 0
      %p55 = por %p53, %p54
      %s56 = ssub.s32 %s22, %s29
      %p57 = scmp.eq.s32.totalorder %s56, 0
      %s59 = sadd.s32 %s58, 1
      %s60 = scalar_select %p57, %s58, %s59
      %p63 = pneg %p57
      %p64 = scmp.eq.s32.totalorder %s22, 1
      %p65 = por %p63, %p64
      %p66 = scmp.ne.s32.totalorder %s58, %s61
      %p67 = scmp.eq.s32.totalorder %s22, 0
      %p68 = por %p66, %p67
      %p69 = scmp.ne.s32.totalorder %s58, %s61
      %p70 = scmp.eq.s32.totalorder %s27, 1
      %p71 = por %p69, %p70
      %p72 = scmp.ne.s32.totalorder %s61, %s62
      %p73 = scmp.eq.s32.totalorder %s27, 0
      %p74 = por %p72, %p73
      %p75 = scmp.ne.s32.totalorder %s61, %s62
      %p76 = scmp.eq.s32.totalorder %s28, 1
      %p77 = por %p75, %p76
      %p79 = scmp.ne.s32.totalorder %s62, %s78
      %p80 = scmp.eq.s32.totalorder %s28, 0
      %p81 = por %p79, %p80
      %s83 = sadd.s32 %s82, 1
      %p86 = scmp.eq.s32.totalorder %s22, 1
      %p87 = scmp.ne.s32.totalorder %s82, %s84
      %p88 = scmp.eq.s32.totalorder %s22, 0
      %p89 = por %p87, %p88
      %p90 = scmp.ne.s32.totalorder %s82, %s84
      %p91 = scmp.eq.s32.totalorder %s27, 1
      %p92 = por %p90, %p91
      %p93 = scmp.ne.s32.totalorder %s84, %s85
      %p94 = scmp.eq.s32.totalorder %s27, 0
      %p95 = por %p93, %p94
      %p96 = scmp.ne.s32.totalorder %s84, %s85
      %p97 = scmp.eq.s32.totalorder %s28, 1
      %p98 = por %p96, %p97
      %p100 = scmp.ne.s32.totalorder %s85, %s99
      %p101 = scmp.eq.s32.totalorder %s28, 0
      %p102 = por %p100, %p101
      %s104 = sadd.s32 %s103, 1
      %p107 = scmp.eq.s32.totalorder %s22, 1
      %p108 = scmp.ne.s32.totalorder %s103, %s105
      %p109 = scmp.eq.s32.totalorder %s22, 0
      %p110 = por %p108, %p109
      %p111 = scmp.ne.s32.totalorder %s103, %s105
      %p112 = scmp.eq.s32.totalorder %s27, 1
      %p113 = por %p111, %p112
      %p114 = scmp.ne.s32.totalorder %s105, %s106
      %p115 = scmp.eq.s32.totalorder %s27, 0
      %p116 = por %p114, %p115
      %p117 = scmp.ne.s32.totalorder %s105, %s106
      %p118 = scmp.eq.s32.totalorder %s28, 1
      %p119 = por %p117, %p118
      %p121 = scmp.ne.s32.totalorder %s106, %s120
      %p122 = scmp.eq.s32.totalorder %s28, 0
      %p123 = por %p121, %p122
      %s125 = sadd.s32 %s124, 1
      %p128 = scmp.eq.s32.totalorder %s22, 1
      %p129 = scmp.ne.s32.totalorder %s124, %s126
      %p130 = scmp.eq.s32.totalorder %s22, 0
      %p131 = por %p129, %p130
      %p132 = scmp.ne.s32.totalorder %s124, %s126
      %p133 = scmp.eq.s32.totalorder %s27, 1
      %p134 = por %p132, %p133
      %p135 = scmp.ne.s32.totalorder %s126, %s127
      %p136 = scmp.eq.s32.totalorder %s27, 0
      %p137 = por %p135, %p136
      %p138 = scmp.ne.s32.totalorder %s126, %s127
      %p139 = scmp.eq.s32.totalorder %s28, 1
      %p140 = por %p138, %p139
      %p142 = scmp.ne.s32.totalorder %s127, %s141
      %p143 = scmp.eq.s32.totalorder %s28, 0
      %p144 = por %p142, %p143
      %s146 = sadd.s32 %s145, 1
      %p149 = scmp.eq.s32.totalorder %s22, 1
      %p150 = scmp.ne.s32.totalorder %s145, %s147
      %p151 = scmp.eq.s32.totalorder %s22, 0
      %p152 = por %p150, %p151
      %p153 = scmp.ne.s32.totalorder %s145, %s147
      %p154 = scmp.eq.s32.totalorder %s27, 1
      %p155 = por %p153, %p154
      %p156 = scmp.ne.s32.totalorder %s147, %s148
      %p157 = scmp.eq.s32.totalorder %s27, 0
      %p158 = por %p156, %p157
      %p159 = scmp.ne.s32.totalorder %s147, %s148
      %p160 = scmp.eq.s32.totalorder %s28, 1
      %p161 = por %p159, %p160
      %p163 = scmp.ne.s32.totalorder %s148, %s162
      %p164 = scmp.eq.s32.totalorder %s28, 0
      %p165 = por %p163, %p164
      %s166 = ssub.s32 %s22, %s29
      %p167 = scmp.eq.s32.totalorder %s166, 0
      %s169 = sadd.s32 %s168, 1
      %s170 = scalar_select %p167, %s168, %s169
      %p173 = pneg %p167
      %p174 = scmp.eq.s32.totalorder %s22, 1
      %p175 = por %p173, %p174
      %p176 = scmp.ne.s32.totalorder %s168, %s171
      %p177 = scmp.eq.s32.totalorder %s22, 0
      %p178 = por %p176, %p177
      %p179 = scmp.ne.s32.totalorder %s168, %s171
      %p180 = scmp.eq.s32.totalorder %s27, 1
      %p181 = por %p179, %p180
      %p182 = scmp.ne.s32.totalorder %s171, %s172
      %p183 = scmp.eq.s32.totalorder %s27, 0
      %p184 = por %p182, %p183
      %p185 = scmp.ne.s32.totalorder %s171, %s172
      %p186 = scmp.eq.s32.totalorder %s28, 1
      %p187 = por %p185, %p186
      %p189 = scmp.ne.s32.totalorder %s172, %s188
      %p190 = scmp.eq.s32.totalorder %s28, 0
      %p191 = por %p189, %p190
      %p192 = scmp.le.s32.totalorder 1, %s22
      %p193 = scmp.lt.s32.totalorder %s22, 3
      %p194 = pnand %p192, %p193
      %p195 = pneg %p194
      // Predicated region
      $region9: #{tpu_custom_call.1} parent=5 // pred_check
        _
      $region10: #{tpu_custom_call.1} parent=5 // pred_check_branch
        %197 = sbr.rel (%p194) target = $region12
      $region11: #{tpu_custom_call.1} parent=5 // pred_region
        %s198 = ssub.s32 %s22, 1
        // Predicated region
        $region13: #{tpu_custom_call.1} parent=11 // pred_check
          %p199 = pneg %p95
        $region14: #{tpu_custom_call.1} parent=11 // pred_check_branch
          %201 = sbr.rel (%p199) target = $region16
        $region15: #{tpu_custom_call.1} parent=11 // pred_region
          %s203 = ssub.s32 16384, 16384
          %204 = vsyncadd [#allocation6], %s203
          %s205 = sshll.u32 [#allocation7], 4
          %s206 = int_to_ptr.vmem [resolvable:$true] %s205
          %211 = dma.hbm_to_vmem [thread:$0]  %s2, 16384, %s206, [#allocation6], 256, 256, 16
        $region16: #{tpu_custom_call.1} parent=11 // pred_fallthru
          _
        // Predicated region
        $region17: #{tpu_custom_call.1} parent=11 // pred_check
          %p212 = pneg %p116
        $region18: #{tpu_custom_call.1} parent=11 // pred_check_branch
          %214 = sbr.rel (%p212) target = $region20
        $region19: #{tpu_custom_call.1} parent=11 // pred_region
          %s216 = ssub.s32 5120, 5120
          %217 = vsyncadd [#allocation9], %s216
          %s218 = sshll.u32 [#allocation8], 4
          %s219 = int_to_ptr.vmem [resolvable:$true] %s218
          %224 = dma.hbm_to_vmem [thread:$0]  %s3, 5120, %s219, [#allocation9], 256, 256, 16
        $region20: #{tpu_custom_call.1} parent=11 // pred_fallthru
          _
        // Predicated region
        $region21: #{tpu_custom_call.1} parent=11 // pred_check
          %p225 = pneg %p137
        $region22: #{tpu_custom_call.1} parent=11 // pred_check_branch
          %227 = sbr.rel (%p225) target = $region24
        $region23: #{tpu_custom_call.1} parent=11 // pred_region
          _
        $region24: #{tpu_custom_call.1} parent=11 // pred_fallthru
          _
        // Predicated region
        $region25: #{tpu_custom_call.1} parent=11 // pred_check
          %p228 = pneg %p158
        $region26: #{tpu_custom_call.1} parent=11 // pred_check_branch
          %230 = sbr.rel (%p228) target = $region28
        $region27: #{tpu_custom_call.1} parent=11 // pred_region
          %s232 = ssub.s32 4096, 4096
          %233 = vsyncadd [#allocation9], %s232
          %s234 = sshll.u32 [#allocation10], 4
          %s235 = int_to_ptr.vmem [resolvable:$true] %s234
          %240 = dma.hbm_to_vmem [thread:$0]  %s5, 4096, %s235, [#allocation9], 64, 64, 4
        $region28: #{tpu_custom_call.1} parent=11 // pred_fallthru
          _
      $region12: #{tpu_custom_call.1} parent=5 // pred_fallthru
        _
      %p241 = scmp.lt.s32.totalorder %s22, 2
      // Predicated region
      $region29: #{tpu_custom_call.1} parent=5 // pred_check
        %p242 = pneg %p241
      $region30: #{tpu_custom_call.1} parent=5 // pred_check_branch
        %244 = sbr.rel (%p242) target = $region32
      $region31: #{tpu_custom_call.1} parent=5 // pred_region
        // Predicated region
        $region33: #{tpu_custom_call.1} parent=31 // pred_check
          %p245 = pneg %p42
        $region34: #{tpu_custom_call.1} parent=31 // pred_check_branch
          %247 = sbr.rel (%p245) target = $region36
        $region35: #{tpu_custom_call.1} parent=31 // pred_region
          %s248 = sand.u32 %s32, 1
          %s249 = scalar_lea.sflag [#allocation3], %s248
          %s250 = sand.u32 %s32, 1
          %s251 = smul.addr %s250, 64
          %s252 = scalar_lea.vmem [#allocation2], %s251
          %s253 = smul.u32 2, %s22
          %s255 = ssub.s32 1024, 1024
          %256 = vsyncadd %s249, %s255
          %s257 = smul.addr %s253, 4
          %s258 = smul.addr %s257, 128
          %s259 = scalar_lea.hbm %s0, %s258
          %s260 = sshll.u32 %s252, 4
          %s261 = int_to_ptr.vmem [resolvable:$true] %s260
          %266 = dma.hbm_to_vmem [thread:$0]  %s259, 1024, %s261, %s249, 512, 512, 32
        $region36: #{tpu_custom_call.1} parent=31 // pred_fallthru
          _
        // Predicated region
        $region37: #{tpu_custom_call.1} parent=31 // pred_check
          %p267 = pneg %p68
        $region38: #{tpu_custom_call.1} parent=31 // pred_check_branch
          %269 = sbr.rel (%p267) target = $region40
        $region39: #{tpu_custom_call.1} parent=31 // pred_region
          %s270 = sand.u32 %s22, 1
          %s271 = scalar_lea.sflag [#allocation6], %s270
          %s272 = sand.u32 %s58, 1
          %s273 = smul.addr %s272, 32
          %s274 = scalar_lea.vmem [#allocation5], %s273
          %s275 = smul.u32 2, %s22
          %s277 = ssub.s32 512, 512
          %278 = vsyncadd %s271, %s277
          %s279 = smul.addr %s275, 2
          %s280 = smul.addr %s279, 128
          %s281 = scalar_lea.hbm %s1, %s280
          %s282 = sshll.u32 %s274, 4
          %s283 = int_to_ptr.vmem [resolvable:$true] %s282
          %288 = dma.hbm_to_vmem [thread:$0]  %s281, 512, %s283, %s271, 256, 256, 16
        $region40: #{tpu_custom_call.1} parent=31 // pred_fallthru
          _
      $region32: #{tpu_custom_call.1} parent=5 // pred_fallthru
        _
      %p289 = scmp.le.s32.totalorder 1, %s22
      %p290 = scmp.lt.s32.totalorder %s22, 3
      %p291 = pnand %p289, %p290
      %p292 = pneg %p291
      // Predicated region
      $region41: #{tpu_custom_call.1} parent=5 // pred_check
        _
      $region42: #{tpu_custom_call.1} parent=5 // pred_check_branch
        %294 = sbr.rel (%p291) target = $region44
      $region43: #{tpu_custom_call.1} parent=5 // pred_region
        %s295 = ssub.s32 %s22, 1
        %s296 = sand.u32 %s35, 1
        %s297 = scalar_lea.sflag [#allocation3], %s296
        %s298 = sand.u32 %s35, 1
        %s299 = smul.addr %s298, 64
        %s300 = scalar_lea.vmem [#allocation2], %s299
        // Predicated region
        $region45: #{tpu_custom_call.1} parent=43 // pred_check
          %p301 = pneg %p48
        $region46: #{tpu_custom_call.1} parent=43 // pred_check_branch
          %303 = sbr.rel (%p301) target = $region48
        $region47: #{tpu_custom_call.1} parent=43 // pred_region
          %304 = dma.done %s297, 1024
        $region48: #{tpu_custom_call.1} parent=43 // pred_fallthru
          _
        %s305 = sand.u32 %s27, 1
        %s306 = scalar_lea.sflag [#allocation6], %s305
        %s307 = sand.u32 %s61, 1
        %s308 = smul.addr %s307, 32
        %s309 = scalar_lea.vmem [#allocation5], %s308
        // Predicated region
        $region49: #{tpu_custom_call.1} parent=43 // pred_check
          %p310 = pneg %p74
        $region50: #{tpu_custom_call.1} parent=43 // pred_check_branch
          %312 = sbr.rel (%p310) target = $region52
        $region51: #{tpu_custom_call.1} parent=43 // pred_region
          %313 = dma.done %s306, 512
        $region52: #{tpu_custom_call.1} parent=43 // pred_fallthru
          _
        // Predicated region
        $region53: #{tpu_custom_call.1} parent=43 // pred_check
          %p314 = pneg %p95
        $region54: #{tpu_custom_call.1} parent=43 // pred_check_branch
          %316 = sbr.rel (%p314) target = $region56
        $region55: #{tpu_custom_call.1} parent=43 // pred_region
          %317 = dma.done [#allocation6], 16384
        $region56: #{tpu_custom_call.1} parent=43 // pred_fallthru
          _
        // Predicated region
        $region57: #{tpu_custom_call.1} parent=43 // pred_check
          %p318 = pneg %p116
        $region58: #{tpu_custom_call.1} parent=43 // pred_check_branch
          %320 = sbr.rel (%p318) target = $region60
        $region59: #{tpu_custom_call.1} parent=43 // pred_region
          %321 = dma.done [#allocation9], 5120
        $region60: #{tpu_custom_call.1} parent=43 // pred_fallthru
          _
        // Predicated region
        $region61: #{tpu_custom_call.1} parent=43 // pred_check
          %p322 = pneg %p158
        $region62: #{tpu_custom_call.1} parent=43 // pred_check_branch
          %324 = sbr.rel (%p322) target = $region64
        $region63: #{tpu_custom_call.1} parent=43 // pred_region
          %325 = dma.done [#allocation9], 4096
        $region64: #{tpu_custom_call.1} parent=43 // pred_fallthru
          _
        %s326 = sand.u32 %s35, 1
        %s327 = scalar_lea.sflag [#allocation3], %s326
        %s328 = sand.u32 %s35, 1
        %s329 = smul.addr %s328, 64
        %s330 = scalar_lea.vmem [#allocation2], %s329
        %p331 = pneg %p48
        %p332 = pneg %p45
        %s333 = sand.u32 %s27, 1
        %s334 = scalar_lea.sflag [#allocation6], %s333
        %s335 = sand.u32 %s61, 1
        %s336 = smul.addr %s335, 32
        %s337 = scalar_lea.vmem [#allocation5], %s336
        %p338 = pneg %p74
        %p339 = pneg %p71
        %p340 = pneg %p95
        %p341 = pneg %p92
        %p342 = pneg %p116
        %p343 = pneg %p113
        %p344 = pneg %p137
        %p345 = pneg %p134
        %p346 = pneg %p158
        %p347 = pneg %p155
        %p348 = pneg %p184
        %p349 = pneg %p181
        %s350 = sand.u32 %s171, 1
        %s351 = scalar_lea.sflag [#allocation4], %s350
        %s352 = sand.u32 %s171, 1
        %s353 = smul.addr %s352, 16
        %s354 = scalar_lea.vmem [#allocation11], %s353
        %s355 = smul.u32 2, %s27
        %s356 = smul.u32 2, %s27
        %s357 = smul.u32 2, %s27
        %v359 = vld [vmem:[%s300] sm:$0xff]
        %v360 = vld [vmem:[%s300 + $0x8] sm:$0xff]
        %v361 = vld [vmem:[%s300 + $0x10] sm:$0xff]
        %v362 = vld [vmem:[%s300 + $0x18] sm:$0xff]
        %v363 = vld [vmem:[%s300 + $0x20] sm:$0xff]
        %v364 = vld [vmem:[%s300 + $0x28] sm:$0xff]
        %v365 = vld [vmem:[%s300 + $0x30] sm:$0xff]
        %v366 = vld [vmem:[%s300 + $0x38] sm:$0xff]
        %v367 = vpack.c.bf16 %v363, %v359
        %v368 = vpack.c.bf16 %v364, %v360
        %v369 = vpack.c.bf16 %v365, %v361
        %v370 = vpack.c.bf16 %v366, %v362
        %v371 = vld [vmem:[%s309] sm:$0xff]
        %v372 = vld [vmem:[%s309 + $0x8] sm:$0xff]
        %v373 = vld [vmem:[%s309 + $0x10] sm:$0xff]
        %v374 = vld [vmem:[%s309 + $0x18] sm:$0xff]
        %v375 = vpack.c.bf16 %v373, %v371
        %v376 = vpack.c.bf16 %v374, %v372
        %v377 = vld [vmem:[#allocation7] sm:$0xff]
        %v378 = vld [vmem:[#allocation7 + $0x8] sm:$0xff]
        %v379 = vld [vmem:[#allocation7 + $0x10] sm:$0xff]
        %v380 = vld [vmem:[#allocation7 + $0x18] sm:$0xff]
        %v381 = vld [vmem:[#allocation7 + $0x20] sm:$0xff]
        %v382 = vld [vmem:[#allocation7 + $0x28] sm:$0xff]
        %v383 = vld [vmem:[#allocation7 + $0x30] sm:$0xff]
        %v384 = vld [vmem:[#allocation7 + $0x38] sm:$0xff]
        %v385 = vld [vmem:[#allocation7 + $0x40] sm:$0xff]
        %v386 = vld [vmem:[#allocation7 + $0x48] sm:$0xff]
        %v387 = vld [vmem:[#allocation7 + $0x50] sm:$0xff]
        %v388 = vld [vmem:[#allocation7 + $0x58] sm:$0xff]
        %v389 = vld [vmem:[#allocation7 + $0x60] sm:$0xff]
        %v390 = vld [vmem:[#allocation7 + $0x68] sm:$0xff]
        %v391 = vld [vmem:[#allocation7 + $0x70] sm:$0xff]
        %v392 = vld [vmem:[#allocation7 + $0x78] sm:$0xff]
        %v393 = vld [vmem:[#allocation7 + $0x80] sm:$0xff]
        %v394 = vld [vmem:[#allocation7 + $0x88] sm:$0xff]
        %v395 = vld [vmem:[#allocation7 + $0x90] sm:$0xff]
        %v396 = vld [vmem:[#allocation7 + $0x98] sm:$0xff]
        %v397 = vld [vmem:[#allocation7 + $0xa0] sm:$0xff]
        %v398 = vld [vmem:[#allocation7 + $0xa8] sm:$0xff]
        %v399 = vld [vmem:[#allocation7 + $0xb0] sm:$0xff]
        %v400 = vld [vmem:[#allocation7 + $0xb8] sm:$0xff]
        %v401 = vld [vmem:[#allocation7 + $0xc0] sm:$0xff]
        %v402 = vld [vmem:[#allocation7 + $0xc8] sm:$0xff]
        %v403 = vld [vmem:[#allocation7 + $0xd0] sm:$0xff]
        %v404 = vld [vmem:[#allocation7 + $0xd8] sm:$0xff]
        %v405 = vld [vmem:[#allocation7 + $0xe0] sm:$0xff]
        %v406 = vld [vmem:[#allocation7 + $0xe8] sm:$0xff]
        %v407 = vld [vmem:[#allocation7 + $0xf0] sm:$0xff]
        %v408 = vld [vmem:[#allocation7 + $0xf8] sm:$0xff]
        %v409 = vld [vmem:[#allocation7 + $0x100] sm:$0xff]
        %v410 = vld [vmem:[#allocation7 + $0x108] sm:$0xff]
        %v411 = vld [vmem:[#allocation7 + $0x110] sm:$0xff]
        %v412 = vld [vmem:[#allocation7 + $0x118] sm:$0xff]
        %v413 = vld [vmem:[#allocation7 + $0x120] sm:$0xff]
        %v414 = vld [vmem:[#allocation7 + $0x128] sm:$0xff]
        %v415 = vld [vmem:[#allocation7 + $0x130] sm:$0xff]
        %v416 = vld [vmem:[#allocation7 + $0x138] sm:$0xff]
        %v417 = vld [vmem:[#allocation7 + $0x140] sm:$0xff]
        %v418 = vld [vmem:[#allocation7 + $0x148] sm:$0xff]
        %v419 = vld [vmem:[#allocation7 + $0x150] sm:$0xff]
        %v420 = vld [vmem:[#allocation7 + $0x158] sm:$0xff]
        %v421 = vld [vmem:[#allocation7 + $0x160] sm:$0xff]
        %v422 = vld [vmem:[#allocation7 + $0x168] sm:$0xff]
        %v423 = vld [vmem:[#allocation7 + $0x170] sm:$0xff]
        %v424 = vld [vmem:[#allocation7 + $0x178] sm:$0xff]
        %v425 = vld [vmem:[#allocation7 + $0x180] sm:$0xff]
        %v426 = vld [vmem:[#allocation7 + $0x188] sm:$0xff]
        %v427 = vld [vmem:[#allocation7 + $0x190] sm:$0xff]
        %v428 = vld [vmem:[#allocation7 + $0x198] sm:$0xff]
        %v429 = vld [vmem:[#allocation7 + $0x1a0] sm:$0xff]
        %v430 = vld [vmem:[#allocation7 + $0x1a8] sm:$0xff]
        %v431 = vld [vmem:[#allocation7 + $0x1b0] sm:$0xff]
        %v432 = vld [vmem:[#allocation7 + $0x1b8] sm:$0xff]
        %v433 = vld [vmem:[#allocation7 + $0x1c0] sm:$0xff]
        %v434 = vld [vmem:[#allocation7 + $0x1c8] sm:$0xff]
        %v435 = vld [vmem:[#allocation7 + $0x1d0] sm:$0xff]
        %v436 = vld [vmem:[#allocation7 + $0x1d8] sm:$0xff]
        %v437 = vld [vmem:[#allocation7 + $0x1e0] sm:$0xff]
        %v438 = vld [vmem:[#allocation7 + $0x1e8] sm:$0xff]
        %v439 = vld [vmem:[#allocation7 + $0x1f0] sm:$0xff]
        %v440 = vld [vmem:[#allocation7 + $0x1f8] sm:$0xff]
        %v441 = vld [vmem:[#allocation7 + $0x200] sm:$0xff]
        %v442 = vld [vmem:[#allocation7 + $0x208] sm:$0xff]
        %v443 = vld [vmem:[#allocation7 + $0x210] sm:$0xff]
        %v444 = vld [vmem:[#allocation7 + $0x218] sm:$0xff]
        %v445 = vld [vmem:[#allocation7 + $0x220] sm:$0xff]
        %v446 = vld [vmem:[#allocation7 + $0x228] sm:$0xff]
        %v447 = vld [vmem:[#allocation7 + $0x230] sm:$0xff]
        %v448 = vld [vmem:[#allocation7 + $0x238] sm:$0xff]
        %v449 = vld [vmem:[#allocation7 + $0x240] sm:$0xff]
        %v450 = vld [vmem:[#allocation7 + $0x248] sm:$0xff]
        %v451 = vld [vmem:[#allocation7 + $0x250] sm:$0xff]
        %v452 = vld [vmem:[#allocation7 + $0x258] sm:$0xff]
        %v453 = vld [vmem:[#allocation7 + $0x260] sm:$0xff]
        %v454 = vld [vmem:[#allocation7 + $0x268] sm:$0xff]
        %v455 = vld [vmem:[#allocation7 + $0x270] sm:$0xff]
        %v456 = vld [vmem:[#allocation7 + $0x278] sm:$0xff]
        %v457 = vld [vmem:[#allocation7 + $0x280] sm:$0xff]
        %v458 = vld [vmem:[#allocation7 + $0x288] sm:$0xff]
        %v459 = vld [vmem:[#allocation7 + $0x290] sm:$0xff]
        %v460 = vld [vmem:[#allocation7 + $0x298] sm:$0xff]
        %v461 = vld [vmem:[#allocation7 + $0x2a0] sm:$0xff]
        %v462 = vld [vmem:[#allocation7 + $0x2a8] sm:$0xff]
        %v463 = vld [vmem:[#allocation7 + $0x2b0] sm:$0xff]
        %v464 = vld [vmem:[#allocation7 + $0x2b8] sm:$0xff]
        %v465 = vld [vmem:[#allocation7 + $0x2c0] sm:$0xff]
        %v466 = vld [vmem:[#allocation7 + $0x2c8] sm:$0xff]
        %v467 = vld [vmem:[#allocation7 + $0x2d0] sm:$0xff]
        %v468 = vld [vmem:[#allocation7 + $0x2d8] sm:$0xff]
        %v469 = vld [vmem:[#allocation7 + $0x2e0] sm:$0xff]
        %v470 = vld [vmem:[#allocation7 + $0x2e8] sm:$0xff]
        %v471 = vld [vmem:[#allocation7 + $0x2f0] sm:$0xff]
        %v472 = vld [vmem:[#allocation7 + $0x2f8] sm:$0xff]
        %v473 = vld [vmem:[#allocation7 + $0x300] sm:$0xff]
        %v474 = vld [vmem:[#allocation7 + $0x308] sm:$0xff]
        %v475 = vld [vmem:[#allocation7 + $0x310] sm:$0xff]
        %v476 = vld [vmem:[#allocation7 + $0x318] sm:$0xff]
        %v477 = vld [vmem:[#allocation7 + $0x320] sm:$0xff]
        %v478 = vld [vmem:[#allocation7 + $0x328] sm:$0xff]
        %v479 = vld [vmem:[#allocation7 + $0x330] sm:$0xff]
        %v480 = vld [vmem:[#allocation7 + $0x338] sm:$0xff]
        %v481 = vld [vmem:[#allocation7 + $0x340] sm:$0xff]
        %v482 = vld [vmem:[#allocation7 + $0x348] sm:$0xff]
        %v483 = vld [vmem:[#allocation7 + $0x350] sm:$0xff]
        %v484 = vld [vmem:[#allocation7 + $0x358] sm:$0xff]
        %v485 = vld [vmem:[#allocation7 + $0x360] sm:$0xff]
        %v486 = vld [vmem:[#allocation7 + $0x368] sm:$0xff]
        %v487 = vld [vmem:[#allocation7 + $0x370] sm:$0xff]
        %v488 = vld [vmem:[#allocation7 + $0x378] sm:$0xff]
        %v489 = vld [vmem:[#allocation7 + $0x380] sm:$0xff]
        %v490 = vld [vmem:[#allocation7 + $0x388] sm:$0xff]
        %v491 = vld [vmem:[#allocation7 + $0x390] sm:$0xff]
        %v492 = vld [vmem:[#allocation7 + $0x398] sm:$0xff]
        %v493 = vld [vmem:[#allocation7 + $0x3a0] sm:$0xff]
        %v494 = vld [vmem:[#allocation7 + $0x3a8] sm:$0xff]
        %v495 = vld [vmem:[#allocation7 + $0x3b0] sm:$0xff]
        %v496 = vld [vmem:[#allocation7 + $0x3b8] sm:$0xff]
        %v497 = vld [vmem:[#allocation7 + $0x3c0] sm:$0xff]
        %v498 = vld [vmem:[#allocation7 + $0x3c8] sm:$0xff]
        %v499 = vld [vmem:[#allocation7 + $0x3d0] sm:$0xff]
        %v500 = vld [vmem:[#allocation7 + $0x3d8] sm:$0xff]
        %v501 = vld [vmem:[#allocation7 + $0x3e0] sm:$0xff]
        %v502 = vld [vmem:[#allocation7 + $0x3e8] sm:$0xff]
        %v503 = vld [vmem:[#allocation7 + $0x3f0] sm:$0xff]
        %v504 = vld [vmem:[#allocation7 + $0x3f8] sm:$0xff]
        %v505 = vld [vmem:[#allocation8] sm:$0xff]
        %v506 = vld [vmem:[#allocation8 + $0x8] sm:$0xff]
        %v507 = vld [vmem:[#allocation8 + $0x10] sm:$0xff]
        %v508 = vld [vmem:[#allocation8 + $0x18] sm:$0xff]
        %v509 = vld [vmem:[#allocation8 + $0x20] sm:$0xff]
        %v510 = vld [vmem:[#allocation8 + $0x28] sm:$0xff]
        %v511 = vld [vmem:[#allocation8 + $0x30] sm:$0xff]
        %v512 = vld [vmem:[#allocation8 + $0x38] sm:$0xff]
        %v513 = vld [vmem:[#allocation8 + $0x40] sm:$0xff]
        %v514 = vld [vmem:[#allocation8 + $0x48] sm:$0xff]
        %v515 = vld [vmem:[#allocation8 + $0x50] sm:$0xff]
        %v516 = vld [vmem:[#allocation8 + $0x58] sm:$0xff]
        %v517 = vld [vmem:[#allocation8 + $0x60] sm:$0xff]
        %v518 = vld [vmem:[#allocation8 + $0x68] sm:$0xff]
        %v519 = vld [vmem:[#allocation8 + $0x70] sm:$0xff]
        %v520 = vld [vmem:[#allocation8 + $0x78] sm:$0xff]
        %v521 = vld [vmem:[#allocation8 + $0x80] sm:$0xff]
        %v522 = vld [vmem:[#allocation8 + $0x88] sm:$0xff]
        %v523 = vld [vmem:[#allocation8 + $0x90] sm:$0xff]
        %v524 = vld [vmem:[#allocation8 + $0x98] sm:$0xff]
        %v525 = vld [vmem:[#allocation8 + $0xa0] sm:$0xff]
        %v526 = vld [vmem:[#allocation8 + $0xa8] sm:$0xff]
        %v527 = vld [vmem:[#allocation8 + $0xb0] sm:$0xff]
        %v528 = vld [vmem:[#allocation8 + $0xb8] sm:$0xff]
        %v529 = vld [vmem:[#allocation8 + $0xc0] sm:$0xff]
        %v530 = vld [vmem:[#allocation8 + $0xc8] sm:$0xff]
        %v531 = vld [vmem:[#allocation8 + $0xd0] sm:$0xff]
        %v532 = vld [vmem:[#allocation8 + $0xd8] sm:$0xff]
        %v533 = vld [vmem:[#allocation8 + $0xe0] sm:$0xff]
        %v534 = vld [vmem:[#allocation8 + $0xe8] sm:$0xff]
        %v535 = vld [vmem:[#allocation8 + $0xf0] sm:$0xff]
        %v536 = vld [vmem:[#allocation8 + $0xf8] sm:$0xff]
        %v537 = vld [vmem:[#allocation8 + $0x100] sm:$0xff]
        %v538 = vld [vmem:[#allocation8 + $0x108] sm:$0xff]
        %v539 = vld [vmem:[#allocation8 + $0x110] sm:$0xff]
        %v540 = vld [vmem:[#allocation8 + $0x118] sm:$0xff]
        %v541 = vld [vmem:[#allocation8 + $0x120] sm:$0xff]
        %v542 = vld [vmem:[#allocation8 + $0x128] sm:$0xff]
        %v543 = vld [vmem:[#allocation8 + $0x130] sm:$0x33]
        %v544 = vld [vmem:[#allocation8 + $0x138] sm:$0x33]
        %v585 = vunpack.c.l.b16 %v505
        %v586 = vunpack.c.h.b16 %v505
        %v587 = vunpack.c.l.b16 %v506
        %v588 = vunpack.c.h.b16 %v506
        %v589 = vunpack.c.l.b16 %v507
        %v590 = vunpack.c.h.b16 %v507
        %v591 = vunpack.c.l.b16 %v508
        %v592 = vunpack.c.h.b16 %v508
        %v593 = vunpack.c.l.b16 %v509
        %v594 = vunpack.c.h.b16 %v509
        %v595 = vunpack.c.l.b16 %v510
        %v596 = vunpack.c.h.b16 %v510
        %v597 = vunpack.c.l.b16 %v511
        %v598 = vunpack.c.h.b16 %v511
        %v599 = vunpack.c.l.b16 %v512
        %v600 = vunpack.c.h.b16 %v512
        %v601 = vunpack.c.l.b16 %v513
        %v602 = vunpack.c.h.b16 %v513
        %v603 = vunpack.c.l.b16 %v514
        %v604 = vunpack.c.h.b16 %v514
        %v605 = vunpack.c.l.b16 %v515
        %v606 = vunpack.c.h.b16 %v515
        %v607 = vunpack.c.l.b16 %v516
        %v608 = vunpack.c.h.b16 %v516
        %v609 = vunpack.c.l.b16 %v517
        %v610 = vunpack.c.h.b16 %v517
        %v611 = vunpack.c.l.b16 %v518
        %v612 = vunpack.c.h.b16 %v518
        %v613 = vunpack.c.l.b16 %v519
        %v614 = vunpack.c.h.b16 %v519
        %v615 = vunpack.c.l.b16 %v520
        %v616 = vunpack.c.h.b16 %v520
        %v617 = vunpack.c.l.b16 %v521
        %v618 = vunpack.c.h.b16 %v521
        %v619 = vunpack.c.l.b16 %v522
        %v620 = vunpack.c.h.b16 %v522
        %v621 = vunpack.c.l.b16 %v523
        %v622 = vunpack.c.h.b16 %v523
        %v623 = vunpack.c.l.b16 %v524
        %v624 = vunpack.c.h.b16 %v524
        %v625 = vunpack.c.l.b16 %v525
        %v626 = vunpack.c.h.b16 %v525
        %v627 = vunpack.c.l.b16 %v526
        %v628 = vunpack.c.h.b16 %v526
        %v629 = vunpack.c.l.b16 %v527
        %v630 = vunpack.c.h.b16 %v527
        %v631 = vunpack.c.l.b16 %v528
        %v632 = vunpack.c.h.b16 %v528
        %v633 = vunpack.c.l.b16 %v529
        %v634 = vunpack.c.h.b16 %v529
        %v635 = vunpack.c.l.b16 %v530
        %v636 = vunpack.c.h.b16 %v530
        %v637 = vunpack.c.l.b16 %v531
        %v638 = vunpack.c.h.b16 %v531
        %v639 = vunpack.c.l.b16 %v532
        %v640 = vunpack.c.h.b16 %v532
        %v641 = vunpack.c.l.b16 %v533
        %v642 = vunpack.c.h.b16 %v533
        %v643 = vunpack.c.l.b16 %v534
        %v644 = vunpack.c.h.b16 %v534
        %v645 = vunpack.c.l.b16 %v535
        %v646 = vunpack.c.h.b16 %v535
        %v647 = vunpack.c.l.b16 %v536
        %v648 = vunpack.c.h.b16 %v536
        %v649 = vunpack.c.l.b16 %v537
        %v650 = vunpack.c.h.b16 %v537
        %v651 = vunpack.c.l.b16 %v538
        %v652 = vunpack.c.h.b16 %v538
        %v653 = vunpack.c.l.b16 %v539
        %v654 = vunpack.c.h.b16 %v539
        %v655 = vunpack.c.l.b16 %v540
        %v656 = vunpack.c.h.b16 %v540
        %v657 = vunpack.c.l.b16 %v541
        %v658 = vunpack.c.h.b16 %v541
        %v659 = vunpack.c.l.b16 %v542
        %v660 = vunpack.c.h.b16 %v542
        %v661 = vunpack.c.l.b16 %v543
        %v662 = vunpack.c.h.b16 %v543
        %v663 = vunpack.c.l.b16 %v544
        %v664 = vunpack.c.h.b16 %v544
        %v665 = vpack.c.b16 %v589, %v585
        %v666 = vpack.c.b16 %v590, %v586
        %v667 = vpack.c.b16 %v591, %v587
        %v668 = vpack.c.b16 %v592, %v588
        %v669 = vpack.c.b16 %v597, %v593
        %v670 = vpack.c.b16 %v598, %v594
        %v671 = vpack.c.b16 %v599, %v595
        %v672 = vpack.c.b16 %v600, %v596
        %v673 = vpack.c.b16 %v605, %v601
        %v674 = vpack.c.b16 %v606, %v602
        %v675 = vpack.c.b16 %v607, %v603
        %v676 = vpack.c.b16 %v608, %v604
        %v677 = vpack.c.b16 %v613, %v609
        %v678 = vpack.c.b16 %v614, %v610
        %v679 = vpack.c.b16 %v615, %v611
        %v680 = vpack.c.b16 %v616, %v612
        %v681 = vpack.c.b16 %v621, %v617
        %v682 = vpack.c.b16 %v622, %v618
        %v683 = vpack.c.b16 %v623, %v619
        %v684 = vpack.c.b16 %v624, %v620
        %v685 = vpack.c.b16 %v629, %v625
        %v686 = vpack.c.b16 %v630, %v626
        %v687 = vpack.c.b16 %v631, %v627
        %v688 = vpack.c.b16 %v632, %v628
        %v689 = vpack.c.b16 %v637, %v633
        %v690 = vpack.c.b16 %v638, %v634
        %v691 = vpack.c.b16 %v639, %v635
        %v692 = vpack.c.b16 %v640, %v636
        %v693 = vpack.c.b16 %v645, %v641
        %v694 = vpack.c.b16 %v646, %v642
        %v695 = vpack.c.b16 %v647, %v643
        %v696 = vpack.c.b16 %v648, %v644
        %v697 = vpack.c.b16 %v653, %v649
        %v698 = vpack.c.b16 %v654, %v650
        %v699 = vpack.c.b16 %v655, %v651
        %v700 = vpack.c.b16 %v656, %v652
        %v701 = vpack.c.b16 %v661, %v657
        %v702 = vpack.c.b16 %v662, %v658
        %v703 = vpack.c.b16 %v663, %v659
        %v704 = vpack.c.b16 %v664, %v660
        %vm741 = vcmask 228352
        %v743 = vsel %vm741, %v376, 0
        %vm745 = vcmask 1045504
        %v747 = vsel %vm745, %v701, 0
        %v750 = vsel %vm745, %v702, 0
        %v753 = vsel %vm745, %v703, 0
        %v756 = vsel %vm745, %v704, 0
        %758 = vmatprep.subr.bf16.mxu0 %v666
        %759 = vmatpush1.bf16.msra.mxu0 %v665
        %760 = vmatprep.subr.bf16.mxu0 %v670
        %761 = vmatpush1.bf16.msra.mxu0 %v669
        %762 = vmatprep.subr.bf16.mxu0 %v674
        %763 = vmatpush1.bf16.msra.mxu0 %v673
        %764 = vmatprep.subr.bf16.mxu0 %v678
        %765 = vmatpush1.bf16.msra.mxu0 %v677
        %766 = vmatprep.subr.bf16.mxu0 %v682
        %767 = vmatpush1.bf16.msra.mxu0 %v681
        %768 = vmatprep.subr.bf16.mxu0 %v686
        %769 = vmatpush1.bf16.msra.mxu0 %v685
        %770 = vmatprep.subr.bf16.mxu0 %v690
        %771 = vmatpush1.bf16.msra.mxu0 %v689
        %772 = vmatprep.subr.bf16.mxu0 %v694
        %773 = vmatpush1.bf16.msra.mxu0 %v693
        %774 = vmatprep.subr.bf16.mxu0 %v698
        %775 = vmatpush1.bf16.msra.mxu0 %v697
        %776 = vmatprep.subr.bf16.mxu0 %v750
        %777 = vmatpush1.bf16.msra.mxu0 %v747
        %778 = vmatprep.subr.bf16.mxu0 0
        %779 = vmatpush1.bf16.msra.mxu0 0
        %780 = vmatprep.subr.bf16.mxu0 0
        %781 = vmatpush1.bf16.msra.mxu0 0
        %782 = vmatprep.subr.bf16.mxu0 0
        %783 = vmatpush1.bf16.msra.mxu0 0
        %784 = vmatprep.subr.bf16.mxu0 0
        %785 = vmatpush1.bf16.msra.mxu0 0
        %786 = vmatprep.subr.bf16.mxu0 0
        %787 = vmatpush1.bf16.msra.mxu0 0
        %788 = vmatprep.subr.bf16.mxu0 0
        %789 = vmatpush1.bf16.msra.mxu0 0
        %790 = vmatprep.mubr.bf16.mxu0 %v743
        %791 = vmatmul.mubr.bf16.gmra.mrb[0].mxu0 %v375
        %v792 = vpop.f32.mrb[0].mxu0
        %v793 = vadd.f32 0.0, %v792
        %v794 = vpop.f32.mrb[0].mxu0
        %v795 = vadd.f32 0.0, %v794
        %v796 = vpop.f32.mrb[0].mxu0
        %v797 = vadd.f32 0.0, %v796
        %v798 = vpop.f32.mrb[0].mxu0
        %v799 = vadd.f32 0.0, %v798
        %800 = vdwg.mxu0
        %801 = vmatprep.subr.bf16.mxu0 %v668
        %802 = vmatpush1.bf16.msra.mxu0 %v667
        %803 = vmatprep.subr.bf16.mxu0 %v672
        %804 = vmatpush1.bf16.msra.mxu0 %v671
        %805 = vmatprep.subr.bf16.mxu0 %v676
        %806 = vmatpush1.bf16.msra.mxu0 %v675
        %807 = vmatprep.subr.bf16.mxu0 %v680
        %808 = vmatpush1.bf16.msra.mxu0 %v679
        %809 = vmatprep.subr.bf16.mxu0 %v684
        %810 = vmatpush1.bf16.msra.mxu0 %v683
        %811 = vmatprep.subr.bf16.mxu0 %v688
        %812 = vmatpush1.bf16.msra.mxu0 %v687
        %813 = vmatprep.subr.bf16.mxu0 %v692
        %814 = vmatpush1.bf16.msra.mxu0 %v691
        %815 = vmatprep.subr.bf16.mxu0 %v696
        %816 = vmatpush1.bf16.msra.mxu0 %v695
        %817 = vmatprep.subr.bf16.mxu0 %v700
        %818 = vmatpush1.bf16.msra.mxu0 %v699
        %819 = vmatprep.subr.bf16.mxu0 %v756
        %820 = vmatpush1.bf16.msra.mxu0 %v753
        %821 = vmatprep.subr.bf16.mxu0 0
        %822 = vmatpush1.bf16.msra.mxu0 0
        %823 = vmatprep.subr.bf16.mxu0 0
        %824 = vmatpush1.bf16.msra.mxu0 0
        %825 = vmatprep.subr.bf16.mxu0 0
        %826 = vmatpush1.bf16.msra.mxu0 0
        %827 = vmatprep.subr.bf16.mxu0 0
        %828 = vmatpush1.bf16.msra.mxu0 0
        %829 = vmatprep.subr.bf16.mxu0 0
        %830 = vmatpush1.bf16.msra.mxu0 0
        %831 = vmatprep.subr.bf16.mxu0 0
        %832 = vmatpush1.bf16.msra.mxu0 0
        %833 = vmatprep.mubr.bf16.mxu0 %v743
        %834 = vmatmul.mubr.bf16.gmra.mrb[0].mxu0 %v375
        %v835 = vpop.f32.mrb[0].mxu0
        %v836 = vadd.f32 0.0, %v835
        %v837 = vpop.f32.mrb[0].mxu0
        %v838 = vadd.f32 0.0, %v837
        %v839 = vpop.f32.mrb[0].mxu0
        %v840 = vadd.f32 0.0, %v839
        %v841 = vpop.f32.mrb[0].mxu0
        %v842 = vadd.f32 0.0, %v841
        %843 = vdwg.mxu0
        %v972 = vunpack.c.l.b16 %v377
        %v973 = vunpack.c.h.b16 %v377
        %v974 = vunpack.c.l.b16 %v378
        %v975 = vunpack.c.h.b16 %v378
        %v976 = vunpack.c.l.b16 %v379
        %v977 = vunpack.c.h.b16 %v379
        %v978 = vunpack.c.l.b16 %v380
        %v979 = vunpack.c.h.b16 %v380
        %v980 = vunpack.c.l.b16 %v381
        %v981 = vunpack.c.h.b16 %v381
        %v982 = vunpack.c.l.b16 %v382
        %v983 = vunpack.c.h.b16 %v382
        %v984 = vunpack.c.l.b16 %v383
        %v985 = vunpack.c.h.b16 %v383
        %v986 = vunpack.c.l.b16 %v384
        %v987 = vunpack.c.h.b16 %v384
        %v988 = vunpack.c.l.b16 %v385
        %v989 = vunpack.c.h.b16 %v385
        %v990 = vunpack.c.l.b16 %v386
        %v991 = vunpack.c.h.b16 %v386
        %v992 = vunpack.c.l.b16 %v387
        %v993 = vunpack.c.h.b16 %v387
        %v994 = vunpack.c.l.b16 %v388
        %v995 = vunpack.c.h.b16 %v388
        %v996 = vunpack.c.l.b16 %v389
        %v997 = vunpack.c.h.b16 %v389
        %v998 = vunpack.c.l.b16 %v390
        %v999 = vunpack.c.h.b16 %v390
        %v1000 = vunpack.c.l.b16 %v391
        %v1001 = vunpack.c.h.b16 %v391
        %v1002 = vunpack.c.l.b16 %v392
        %v1003 = vunpack.c.h.b16 %v392
        %v1004 = vunpack.c.l.b16 %v393
        %v1005 = vunpack.c.h.b16 %v393
        %v1006 = vunpack.c.l.b16 %v394
        %v1007 = vunpack.c.h.b16 %v394
        %v1008 = vunpack.c.l.b16 %v395
        %v1009 = vunpack.c.h.b16 %v395
        %v1010 = vunpack.c.l.b16 %v396
        %v1011 = vunpack.c.h.b16 %v396
        %v1012 = vunpack.c.l.b16 %v397
        %v1013 = vunpack.c.h.b16 %v397
        %v1014 = vunpack.c.l.b16 %v398
        %v1015 = vunpack.c.h.b16 %v398
        %v1016 = vunpack.c.l.b16 %v399
        %v1017 = vunpack.c.h.b16 %v399
        %v1018 = vunpack.c.l.b16 %v400
        %v1019 = vunpack.c.h.b16 %v400
        %v1020 = vunpack.c.l.b16 %v401
        %v1021 = vunpack.c.h.b16 %v401
        %v1022 = vunpack.c.l.b16 %v402
        %v1023 = vunpack.c.h.b16 %v402
        %v1024 = vunpack.c.l.b16 %v403
        %v1025 = vunpack.c.h.b16 %v403
        %v1026 = vunpack.c.l.b16 %v404
        %v1027 = vunpack.c.h.b16 %v404
        %v1028 = vunpack.c.l.b16 %v405
        %v1029 = vunpack.c.h.b16 %v405
        %v1030 = vunpack.c.l.b16 %v406
        %v1031 = vunpack.c.h.b16 %v406
        %v1032 = vunpack.c.l.b16 %v407
        %v1033 = vunpack.c.h.b16 %v407
        %v1034 = vunpack.c.l.b16 %v408
        %v1035 = vunpack.c.h.b16 %v408
        %v1036 = vunpack.c.l.b16 %v409
        %v1037 = vunpack.c.h.b16 %v409
        %v1038 = vunpack.c.l.b16 %v410
        %v1039 = vunpack.c.h.b16 %v410
        %v1040 = vunpack.c.l.b16 %v411
        %v1041 = vunpack.c.h.b16 %v411
        %v1042 = vunpack.c.l.b16 %v412
        %v1043 = vunpack.c.h.b16 %v412
        %v1044 = vunpack.c.l.b16 %v413
        %v1045 = vunpack.c.h.b16 %v413
        %v1046 = vunpack.c.l.b16 %v414
        %v1047 = vunpack.c.h.b16 %v414
        %v1048 = vunpack.c.l.b16 %v415
        %v1049 = vunpack.c.h.b16 %v415
        %v1050 = vunpack.c.l.b16 %v416
        %v1051 = vunpack.c.h.b16 %v416
        %v1052 = vunpack.c.l.b16 %v417
        %v1053 = vunpack.c.h.b16 %v417
        %v1054 = vunpack.c.l.b16 %v418
        %v1055 = vunpack.c.h.b16 %v418
        %v1056 = vunpack.c.l.b16 %v419
        %v1057 = vunpack.c.h.b16 %v419
        %v1058 = vunpack.c.l.b16 %v420
        %v1059 = vunpack.c.h.b16 %v420
        %v1060 = vunpack.c.l.b16 %v421
        %v1061 = vunpack.c.h.b16 %v421
        %v1062 = vunpack.c.l.b16 %v422
        %v1063 = vunpack.c.h.b16 %v422
        %v1064 = vunpack.c.l.b16 %v423
        %v1065 = vunpack.c.h.b16 %v423
        %v1066 = vunpack.c.l.b16 %v424
        %v1067 = vunpack.c.h.b16 %v424
        %v1068 = vunpack.c.l.b16 %v425
        %v1069 = vunpack.c.h.b16 %v425
        %v1070 = vunpack.c.l.b16 %v426
        %v1071 = vunpack.c.h.b16 %v426
        %v1072 = vunpack.c.l.b16 %v427
        %v1073 = vunpack.c.h.b16 %v427
        %v1074 = vunpack.c.l.b16 %v428
        %v1075 = vunpack.c.h.b16 %v428
        %v1076 = vunpack.c.l.b16 %v429
        %v1077 = vunpack.c.h.b16 %v429
        %v1078 = vunpack.c.l.b16 %v430
        %v1079 = vunpack.c.h.b16 %v430
        %v1080 = vunpack.c.l.b16 %v431
        %v1081 = vunpack.c.h.b16 %v431
        %v1082 = vunpack.c.l.b16 %v432
        %v1083 = vunpack.c.h.b16 %v432
        %v1084 = vunpack.c.l.b16 %v433
        %v1085 = vunpack.c.h.b16 %v433
        %v1086 = vunpack.c.l.b16 %v434
        %v1087 = vunpack.c.h.b16 %v434
        %v1088 = vunpack.c.l.b16 %v435
        %v1089 = vunpack.c.h.b16 %v435
        %v1090 = vunpack.c.l.b16 %v436
        %v1091 = vunpack.c.h.b16 %v436
        %v1092 = vunpack.c.l.b16 %v437
        %v1093 = vunpack.c.h.b16 %v437
        %v1094 = vunpack.c.l.b16 %v438
        %v1095 = vunpack.c.h.b16 %v438
        %v1096 = vunpack.c.l.b16 %v439
        %v1097 = vunpack.c.h.b16 %v439
        %v1098 = vunpack.c.l.b16 %v440
        %v1099 = vunpack.c.h.b16 %v440
        %v1100 = vunpack.c.l.b16 %v441
        %v1101 = vunpack.c.h.b16 %v441
        %v1102 = vunpack.c.l.b16 %v442
        %v1103 = vunpack.c.h.b16 %v442
        %v1104 = vunpack.c.l.b16 %v443
        %v1105 = vunpack.c.h.b16 %v443
        %v1106 = vunpack.c.l.b16 %v444
        %v1107 = vunpack.c.h.b16 %v444
        %v1108 = vunpack.c.l.b16 %v445
        %v1109 = vunpack.c.h.b16 %v445
        %v1110 = vunpack.c.l.b16 %v446
        %v1111 = vunpack.c.h.b16 %v446
        %v1112 = vunpack.c.l.b16 %v447
        %v1113 = vunpack.c.h.b16 %v447
        %v1114 = vunpack.c.l.b16 %v448
        %v1115 = vunpack.c.h.b16 %v448
        %v1116 = vunpack.c.l.b16 %v449
        %v1117 = vunpack.c.h.b16 %v449
        %v1118 = vunpack.c.l.b16 %v450
        %v1119 = vunpack.c.h.b16 %v450
        %v1120 = vunpack.c.l.b16 %v451
        %v1121 = vunpack.c.h.b16 %v451
        %v1122 = vunpack.c.l.b16 %v452
        %v1123 = vunpack.c.h.b16 %v452
        %v1124 = vunpack.c.l.b16 %v453
        %v1125 = vunpack.c.h.b16 %v453
        %v1126 = vunpack.c.l.b16 %v454
        %v1127 = vunpack.c.h.b16 %v454
        %v1128 = vunpack.c.l.b16 %v455
        %v1129 = vunpack.c.h.b16 %v455
        %v1130 = vunpack.c.l.b16 %v456
        %v1131 = vunpack.c.h.b16 %v456
        %v1132 = vunpack.c.l.b16 %v457
        %v1133 = vunpack.c.h.b16 %v457
        %v1134 = vunpack.c.l.b16 %v458
        %v1135 = vunpack.c.h.b16 %v458
        %v1136 = vunpack.c.l.b16 %v459
        %v1137 = vunpack.c.h.b16 %v459
        %v1138 = vunpack.c.l.b16 %v460
        %v1139 = vunpack.c.h.b16 %v460
        %v1140 = vunpack.c.l.b16 %v461
        %v1141 = vunpack.c.h.b16 %v461
        %v1142 = vunpack.c.l.b16 %v462
        %v1143 = vunpack.c.h.b16 %v462
        %v1144 = vunpack.c.l.b16 %v463
        %v1145 = vunpack.c.h.b16 %v463
        %v1146 = vunpack.c.l.b16 %v464
        %v1147 = vunpack.c.h.b16 %v464
        %v1148 = vunpack.c.l.b16 %v465
        %v1149 = vunpack.c.h.b16 %v465
        %v1150 = vunpack.c.l.b16 %v466
        %v1151 = vunpack.c.h.b16 %v466
        %v1152 = vunpack.c.l.b16 %v467
        %v1153 = vunpack.c.h.b16 %v467
        %v1154 = vunpack.c.l.b16 %v468
        %v1155 = vunpack.c.h.b16 %v468
        %v1156 = vunpack.c.l.b16 %v469
        %v1157 = vunpack.c.h.b16 %v469
        %v1158 = vunpack.c.l.b16 %v470
        %v1159 = vunpack.c.h.b16 %v470
        %v1160 = vunpack.c.l.b16 %v471
        %v1161 = vunpack.c.h.b16 %v471
        %v1162 = vunpack.c.l.b16 %v472
        %v1163 = vunpack.c.h.b16 %v472
        %v1164 = vunpack.c.l.b16 %v473
        %v1165 = vunpack.c.h.b16 %v473
        %v1166 = vunpack.c.l.b16 %v474
        %v1167 = vunpack.c.h.b16 %v474
        %v1168 = vunpack.c.l.b16 %v475
        %v1169 = vunpack.c.h.b16 %v475
        %v1170 = vunpack.c.l.b16 %v476
        %v1171 = vunpack.c.h.b16 %v476
        %v1172 = vunpack.c.l.b16 %v477
        %v1173 = vunpack.c.h.b16 %v477
        %v1174 = vunpack.c.l.b16 %v478
        %v1175 = vunpack.c.h.b16 %v478
        %v1176 = vunpack.c.l.b16 %v479
        %v1177 = vunpack.c.h.b16 %v479
        %v1178 = vunpack.c.l.b16 %v480
        %v1179 = vunpack.c.h.b16 %v480
        %v1180 = vunpack.c.l.b16 %v481
        %v1181 = vunpack.c.h.b16 %v481
        %v1182 = vunpack.c.l.b16 %v482
        %v1183 = vunpack.c.h.b16 %v482
        %v1184 = vunpack.c.l.b16 %v483
        %v1185 = vunpack.c.h.b16 %v483
        %v1186 = vunpack.c.l.b16 %v484
        %v1187 = vunpack.c.h.b16 %v484
        %v1188 = vunpack.c.l.b16 %v485
        %v1189 = vunpack.c.h.b16 %v485
        %v1190 = vunpack.c.l.b16 %v486
        %v1191 = vunpack.c.h.b16 %v486
        %v1192 = vunpack.c.l.b16 %v487
        %v1193 = vunpack.c.h.b16 %v487
        %v1194 = vunpack.c.l.b16 %v488
        %v1195 = vunpack.c.h.b16 %v488
        %v1196 = vunpack.c.l.b16 %v489
        %v1197 = vunpack.c.h.b16 %v489
        %v1198 = vunpack.c.l.b16 %v490
        %v1199 = vunpack.c.h.b16 %v490
        %v1200 = vunpack.c.l.b16 %v491
        %v1201 = vunpack.c.h.b16 %v491
        %v1202 = vunpack.c.l.b16 %v492
        %v1203 = vunpack.c.h.b16 %v492
        %v1204 = vunpack.c.l.b16 %v493
        %v1205 = vunpack.c.h.b16 %v493
        %v1206 = vunpack.c.l.b16 %v494
        %v1207 = vunpack.c.h.b16 %v494
        %v1208 = vunpack.c.l.b16 %v495
        %v1209 = vunpack.c.h.b16 %v495
        %v1210 = vunpack.c.l.b16 %v496
        %v1211 = vunpack.c.h.b16 %v496
        %v1212 = vunpack.c.l.b16 %v497
        %v1213 = vunpack.c.h.b16 %v497
        %v1214 = vunpack.c.l.b16 %v498
        %v1215 = vunpack.c.h.b16 %v498
        %v1216 = vunpack.c.l.b16 %v499
        %v1217 = vunpack.c.h.b16 %v499
        %v1218 = vunpack.c.l.b16 %v500
        %v1219 = vunpack.c.h.b16 %v500
        %v1220 = vunpack.c.l.b16 %v501
        %v1221 = vunpack.c.h.b16 %v501
        %v1222 = vunpack.c.l.b16 %v502
        %v1223 = vunpack.c.h.b16 %v502
        %v1224 = vunpack.c.l.b16 %v503
        %v1225 = vunpack.c.h.b16 %v503
        %v1226 = vunpack.c.l.b16 %v504
        %v1227 = vunpack.c.h.b16 %v504
        %v1228 = vpack.c.b16 %v976, %v972
        %v1229 = vpack.c.b16 %v977, %v973
        %v1230 = vpack.c.b16 %v978, %v974
        %v1231 = vpack.c.b16 %v979, %v975
        %v1232 = vpack.c.b16 %v984, %v980
        %v1233 = vpack.c.b16 %v985, %v981
        %v1234 = vpack.c.b16 %v986, %v982
        %v1235 = vpack.c.b16 %v987, %v983
        %v1236 = vpack.c.b16 %v992, %v988
        %v1237 = vpack.c.b16 %v993, %v989
        %v1238 = vpack.c.b16 %v994, %v990
        %v1239 = vpack.c.b16 %v995, %v991
        %v1240 = vpack.c.b16 %v1000, %v996
        %v1241 = vpack.c.b16 %v1001, %v997
        %v1242 = vpack.c.b16 %v1002, %v998
        %v1243 = vpack.c.b16 %v1003, %v999
        %v1244 = vpack.c.b16 %v1008, %v1004
        %v1245 = vpack.c.b16 %v1009, %v1005
        %v1246 = vpack.c.b16 %v1010, %v1006
        %v1247 = vpack.c.b16 %v1011, %v1007
        %v1248 = vpack.c.b16 %v1016, %v1012
        %v1249 = vpack.c.b16 %v1017, %v1013
        %v1250 = vpack.c.b16 %v1018, %v1014
        %v1251 = vpack.c.b16 %v1019, %v1015
        %v1252 = vpack.c.b16 %v1024, %v1020
        %v1253 = vpack.c.b16 %v1025, %v1021
        %v1254 = vpack.c.b16 %v1026, %v1022
        %v1255 = vpack.c.b16 %v1027, %v1023
        %v1256 = vpack.c.b16 %v1032, %v1028
        %v1257 = vpack.c.b16 %v1033, %v1029
        %v1258 = vpack.c.b16 %v1034, %v1030
        %v1259 = vpack.c.b16 %v1035, %v1031
        %v1260 = vpack.c.b16 %v1040, %v1036
        %v1261 = vpack.c.b16 %v1041, %v1037
        %v1262 = vpack.c.b16 %v1042, %v1038
        %v1263 = vpack.c.b16 %v1043, %v1039
        %v1264 = vpack.c.b16 %v1048, %v1044
        %v1265 = vpack.c.b16 %v1049, %v1045
        %v1266 = vpack.c.b16 %v1050, %v1046
        %v1267 = vpack.c.b16 %v1051, %v1047
        %v1268 = vpack.c.b16 %v1056, %v1052
        %v1269 = vpack.c.b16 %v1057, %v1053
        %v1270 = vpack.c.b16 %v1058, %v1054
        %v1271 = vpack.c.b16 %v1059, %v1055
        %v1272 = vpack.c.b16 %v1064, %v1060
        %v1273 = vpack.c.b16 %v1065, %v1061
        %v1274 = vpack.c.b16 %v1066, %v1062
        %v1275 = vpack.c.b16 %v1067, %v1063
        %v1276 = vpack.c.b16 %v1072, %v1068
        %v1277 = vpack.c.b16 %v1073, %v1069
        %v1278 = vpack.c.b16 %v1074, %v1070
        %v1279 = vpack.c.b16 %v1075, %v1071
        %v1280 = vpack.c.b16 %v1080, %v1076
        %v1281 = vpack.c.b16 %v1081, %v1077
        %v1282 = vpack.c.b16 %v1082, %v1078
        %v1283 = vpack.c.b16 %v1083, %v1079
        %v1284 = vpack.c.b16 %v1088, %v1084
        %v1285 = vpack.c.b16 %v1089, %v1085
        %v1286 = vpack.c.b16 %v1090, %v1086
        %v1287 = vpack.c.b16 %v1091, %v1087
        %v1288 = vpack.c.b16 %v1096, %v1092
        %v1289 = vpack.c.b16 %v1097, %v1093
        %v1290 = vpack.c.b16 %v1098, %v1094
        %v1291 = vpack.c.b16 %v1099, %v1095
        %v1292 = vpack.c.b16 %v1104, %v1100
        %v1293 = vpack.c.b16 %v1105, %v1101
        %v1294 = vpack.c.b16 %v1106, %v1102
        %v1295 = vpack.c.b16 %v1107, %v1103
        %v1296 = vpack.c.b16 %v1112, %v1108
        %v1297 = vpack.c.b16 %v1113, %v1109
        %v1298 = vpack.c.b16 %v1114, %v1110
        %v1299 = vpack.c.b16 %v1115, %v1111
        %v1300 = vpack.c.b16 %v1120, %v1116
        %v1301 = vpack.c.b16 %v1121, %v1117
        %v1302 = vpack.c.b16 %v1122, %v1118
        %v1303 = vpack.c.b16 %v1123, %v1119
        %v1304 = vpack.c.b16 %v1128, %v1124
        %v1305 = vpack.c.b16 %v1129, %v1125
        %v1306 = vpack.c.b16 %v1130, %v1126
        %v1307 = vpack.c.b16 %v1131, %v1127
        %v1308 = vpack.c.b16 %v1136, %v1132
        %v1309 = vpack.c.b16 %v1137, %v1133
        %v1310 = vpack.c.b16 %v1138, %v1134
        %v1311 = vpack.c.b16 %v1139, %v1135
        %v1312 = vpack.c.b16 %v1144, %v1140
        %v1313 = vpack.c.b16 %v1145, %v1141
        %v1314 = vpack.c.b16 %v1146, %v1142
        %v1315 = vpack.c.b16 %v1147, %v1143
        %v1316 = vpack.c.b16 %v1152, %v1148
        %v1317 = vpack.c.b16 %v1153, %v1149
        %v1318 = vpack.c.b16 %v1154, %v1150
        %v1319 = vpack.c.b16 %v1155, %v1151
        %v1320 = vpack.c.b16 %v1160, %v1156
        %v1321 = vpack.c.b16 %v1161, %v1157
        %v1322 = vpack.c.b16 %v1162, %v1158
        %v1323 = vpack.c.b16 %v1163, %v1159
        %v1324 = vpack.c.b16 %v1168, %v1164
        %v1325 = vpack.c.b16 %v1169, %v1165
        %v1326 = vpack.c.b16 %v1170, %v1166
        %v1327 = vpack.c.b16 %v1171, %v1167
        %v1328 = vpack.c.b16 %v1176, %v1172
        %v1329 = vpack.c.b16 %v1177, %v1173
        %v1330 = vpack.c.b16 %v1178, %v1174
        %v1331 = vpack.c.b16 %v1179, %v1175
        %v1332 = vpack.c.b16 %v1184, %v1180
        %v1333 = vpack.c.b16 %v1185, %v1181
        %v1334 = vpack.c.b16 %v1186, %v1182
        %v1335 = vpack.c.b16 %v1187, %v1183
        %v1336 = vpack.c.b16 %v1192, %v1188
        %v1337 = vpack.c.b16 %v1193, %v1189
        %v1338 = vpack.c.b16 %v1194, %v1190
        %v1339 = vpack.c.b16 %v1195, %v1191
        %v1340 = vpack.c.b16 %v1200, %v1196
        %v1341 = vpack.c.b16 %v1201, %v1197
        %v1342 = vpack.c.b16 %v1202, %v1198
        %v1343 = vpack.c.b16 %v1203, %v1199
        %v1344 = vpack.c.b16 %v1208, %v1204
        %v1345 = vpack.c.b16 %v1209, %v1205
        %v1346 = vpack.c.b16 %v1210, %v1206
        %v1347 = vpack.c.b16 %v1211, %v1207
        %v1348 = vpack.c.b16 %v1216, %v1212
        %v1349 = vpack.c.b16 %v1217, %v1213
        %v1350 = vpack.c.b16 %v1218, %v1214
        %v1351 = vpack.c.b16 %v1219, %v1215
        %v1352 = vpack.c.b16 %v1224, %v1220
        %v1353 = vpack.c.b16 %v1225, %v1221
        %v1354 = vpack.c.b16 %v1226, %v1222
        %v1355 = vpack.c.b16 %v1227, %v1223
        %1484 = vmatprep.subr.bf16.mxu0 %v1229
        %1485 = vmatpush1.bf16.msra.mxu0 %v1228
        %1486 = vmatprep.subr.bf16.mxu0 %v1233
        %1487 = vmatpush1.bf16.msra.mxu0 %v1232
        %1488 = vmatprep.subr.bf16.mxu0 %v1237
        %1489 = vmatpush1.bf16.msra.mxu0 %v1236
        %1490 = vmatprep.subr.bf16.mxu0 %v1241
        %1491 = vmatpush1.bf16.msra.mxu0 %v1240
        %1492 = vmatprep.subr.bf16.mxu0 %v1245
        %1493 = vmatpush1.bf16.msra.mxu0 %v1244
        %1494 = vmatprep.subr.bf16.mxu0 %v1249
        %1495 = vmatpush1.bf16.msra.mxu0 %v1248
        %1496 = vmatprep.subr.bf16.mxu0 %v1253
        %1497 = vmatpush1.bf16.msra.mxu0 %v1252
        %1498 = vmatprep.subr.bf16.mxu0 %v1257
        %1499 = vmatpush1.bf16.msra.mxu0 %v1256
        %1500 = vmatprep.subr.bf16.mxu0 %v1261
        %1501 = vmatpush1.bf16.msra.mxu0 %v1260
        %1502 = vmatprep.subr.bf16.mxu0 %v1265
        %1503 = vmatpush1.bf16.msra.mxu0 %v1264
        %1504 = vmatprep.subr.bf16.mxu0 %v1269
        %1505 = vmatpush1.bf16.msra.mxu0 %v1268
        %1506 = vmatprep.subr.bf16.mxu0 %v1273
        %1507 = vmatpush1.bf16.msra.mxu0 %v1272
        %1508 = vmatprep.subr.bf16.mxu0 %v1277
        %1509 = vmatpush1.bf16.msra.mxu0 %v1276
        %1510 = vmatprep.subr.bf16.mxu0 %v1281
        %1511 = vmatpush1.bf16.msra.mxu0 %v1280
        %1512 = vmatprep.subr.bf16.mxu0 %v1285
        %1513 = vmatpush1.bf16.msra.mxu0 %v1284
        %1514 = vmatprep.subr.bf16.mxu0 %v1289
        %1515 = vmatpush1.bf16.msra.mxu0 %v1288
        %1516 = vmatprep.mubr.bf16.mxu0 %v368
        %1517 = vmatmul.mubr.bf16.gmra.mrb[0].mxu0 %v367
        %v1518 = vpop.f32.mrb[0].mxu0
        %v1519 = vadd.f32 %v793, %v1518
        %v1520 = vpop.f32.mrb[0].mxu0
        %v1521 = vadd.f32 %v795, %v1520
        %v1522 = vpop.f32.mrb[0].mxu0
        %v1523 = vadd.f32 %v797, %v1522
        %v1524 = vpop.f32.mrb[0].mxu0
        %v1525 = vadd.f32 %v799, %v1524
        %1526 = vdwg.mxu0
        %1527 = vmatprep.subr.bf16.mxu0 %v1293
        %1528 = vmatpush1.bf16.msra.mxu0 %v1292
        %1529 = vmatprep.subr.bf16.mxu0 %v1297
        %1530 = vmatpush1.bf16.msra.mxu0 %v1296
        %1531 = vmatprep.subr.bf16.mxu0 %v1301
        %1532 = vmatpush1.bf16.msra.mxu0 %v1300
        %1533 = vmatprep.subr.bf16.mxu0 %v1305
        %1534 = vmatpush1.bf16.msra.mxu0 %v1304
        %1535 = vmatprep.subr.bf16.mxu0 %v1309
        %1536 = vmatpush1.bf16.msra.mxu0 %v1308
        %1537 = vmatprep.subr.bf16.mxu0 %v1313
        %1538 = vmatpush1.bf16.msra.mxu0 %v1312
        %1539 = vmatprep.subr.bf16.mxu0 %v1317
        %1540 = vmatpush1.bf16.msra.mxu0 %v1316
        %1541 = vmatprep.subr.bf16.mxu0 %v1321
        %1542 = vmatpush1.bf16.msra.mxu0 %v1320
        %1543 = vmatprep.subr.bf16.mxu0 %v1325
        %1544 = vmatpush1.bf16.msra.mxu0 %v1324
        %1545 = vmatprep.subr.bf16.mxu0 %v1329
        %1546 = vmatpush1.bf16.msra.mxu0 %v1328
        %1547 = vmatprep.subr.bf16.mxu0 %v1333
        %1548 = vmatpush1.bf16.msra.mxu0 %v1332
        %1549 = vmatprep.subr.bf16.mxu0 %v1337
        %1550 = vmatpush1.bf16.msra.mxu0 %v1336
        %1551 = vmatprep.subr.bf16.mxu0 %v1341
        %1552 = vmatpush1.bf16.msra.mxu0 %v1340
        %1553 = vmatprep.subr.bf16.mxu0 %v1345
        %1554 = vmatpush1.bf16.msra.mxu0 %v1344
        %1555 = vmatprep.subr.bf16.mxu0 %v1349
        %1556 = vmatpush1.bf16.msra.mxu0 %v1348
        %1557 = vmatprep.subr.bf16.mxu0 %v1353
        %1558 = vmatpush1.bf16.msra.mxu0 %v1352
        %1559 = vmatprep.mubr.bf16.mxu0 %v370
        %1560 = vmatmul.mubr.bf16.gmra.mrb[0].mxu0 %v369
        %v1561 = vpop.f32.mrb[0].mxu0
        %v1562 = vadd.f32 %v1519, %v1561
        %v1563 = vpop.f32.mrb[0].mxu0
        %v1564 = vadd.f32 %v1521, %v1563
        %v1565 = vpop.f32.mrb[0].mxu0
        %v1566 = vadd.f32 %v1523, %v1565
        %v1567 = vpop.f32.mrb[0].mxu0
        %v1568 = vadd.f32 %v1525, %v1567
        %1569 = vdwg.mxu0
        %1570 = vmatprep.subr.bf16.mxu0 %v1231
        %1571 = vmatpush1.bf16.msra.mxu0 %v1230
        %1572 = vmatprep.subr.bf16.mxu0 %v1235
        %1573 = vmatpush1.bf16.msra.mxu0 %v1234
        %1574 = vmatprep.subr.bf16.mxu0 %v1239
        %1575 = vmatpush1.bf16.msra.mxu0 %v1238
        %1576 = vmatprep.subr.bf16.mxu0 %v1243
        %1577 = vmatpush1.bf16.msra.mxu0 %v1242
        %1578 = vmatprep.subr.bf16.mxu0 %v1247
        %1579 = vmatpush1.bf16.msra.mxu0 %v1246
        %1580 = vmatprep.subr.bf16.mxu0 %v1251
        %1581 = vmatpush1.bf16.msra.mxu0 %v1250
        %1582 = vmatprep.subr.bf16.mxu0 %v1255
        %1583 = vmatpush1.bf16.msra.mxu0 %v1254
        %1584 = vmatprep.subr.bf16.mxu0 %v1259
        %1585 = vmatpush1.bf16.msra.mxu0 %v1258
        %1586 = vmatprep.subr.bf16.mxu0 %v1263
        %1587 = vmatpush1.bf16.msra.mxu0 %v1262
        %1588 = vmatprep.subr.bf16.mxu0 %v1267
        %1589 = vmatpush1.bf16.msra.mxu0 %v1266
        %1590 = vmatprep.subr.bf16.mxu0 %v1271
        %1591 = vmatpush1.bf16.msra.mxu0 %v1270
        %1592 = vmatprep.subr.bf16.mxu0 %v1275
        %1593 = vmatpush1.bf16.msra.mxu0 %v1274
        %1594 = vmatprep.subr.bf16.mxu0 %v1279
        %1595 = vmatpush1.bf16.msra.mxu0 %v1278
        %1596 = vmatprep.subr.bf16.mxu0 %v1283
        %1597 = vmatpush1.bf16.msra.mxu0 %v1282
        %1598 = vmatprep.subr.bf16.mxu0 %v1287
        %1599 = vmatpush1.bf16.msra.mxu0 %v1286
        %1600 = vmatprep.subr.bf16.mxu0 %v1291
        %1601 = vmatpush1.bf16.msra.mxu0 %v1290
        %1602 = vmatprep.mubr.bf16.mxu0 %v368
        %1603 = vmatmul.mubr.bf16.gmra.mrb[0].mxu0 %v367
        %v1604 = vpop.f32.mrb[0].mxu0
        %v1605 = vadd.f32 %v836, %v1604
        %v1606 = vpop.f32.mrb[0].mxu0
        %v1607 = vadd.f32 %v838, %v1606
        %v1608 = vpop.f32.mrb[0].mxu0
        %v1609 = vadd.f32 %v840, %v1608
        %v1610 = vpop.f32.mrb[0].mxu0
        %v1611 = vadd.f32 %v842, %v1610
        %1612 = vdwg.mxu0
        %1613 = vmatprep.subr.bf16.mxu0 %v1295
        %1614 = vmatpush1.bf16.msra.mxu0 %v1294
        %1615 = vmatprep.subr.bf16.mxu0 %v1299
        %1616 = vmatpush1.bf16.msra.mxu0 %v1298
        %1617 = vmatprep.subr.bf16.mxu0 %v1303
        %1618 = vmatpush1.bf16.msra.mxu0 %v1302
        %1619 = vmatprep.subr.bf16.mxu0 %v1307
        %1620 = vmatpush1.bf16.msra.mxu0 %v1306
        %1621 = vmatprep.subr.bf16.mxu0 %v1311
        %1622 = vmatpush1.bf16.msra.mxu0 %v1310
        %1623 = vmatprep.subr.bf16.mxu0 %v1315
        %1624 = vmatpush1.bf16.msra.mxu0 %v1314
        %1625 = vmatprep.subr.bf16.mxu0 %v1319
        %1626 = vmatpush1.bf16.msra.mxu0 %v1318
        %1627 = vmatprep.subr.bf16.mxu0 %v1323
        %1628 = vmatpush1.bf16.msra.mxu0 %v1322
        %1629 = vmatprep.subr.bf16.mxu0 %v1327
        %1630 = vmatpush1.bf16.msra.mxu0 %v1326
        %1631 = vmatprep.subr.bf16.mxu0 %v1331
        %1632 = vmatpush1.bf16.msra.mxu0 %v1330
        %1633 = vmatprep.subr.bf16.mxu0 %v1335
        %1634 = vmatpush1.bf16.msra.mxu0 %v1334
        %1635 = vmatprep.subr.bf16.mxu0 %v1339
        %1636 = vmatpush1.bf16.msra.mxu0 %v1338
        %1637 = vmatprep.subr.bf16.mxu0 %v1343
        %1638 = vmatpush1.bf16.msra.mxu0 %v1342
        %1639 = vmatprep.subr.bf16.mxu0 %v1347
        %1640 = vmatpush1.bf16.msra.mxu0 %v1346
        %1641 = vmatprep.subr.bf16.mxu0 %v1351
        %1642 = vmatpush1.bf16.msra.mxu0 %v1350
        %1643 = vmatprep.subr.bf16.mxu0 %v1355
        %1644 = vmatpush1.bf16.msra.mxu0 %v1354
        %1645 = vmatprep.mubr.bf16.mxu0 %v370
        %1646 = vmatmul.mubr.bf16.gmra.mrb[0].mxu0 %v369
        %v1647 = vpop.f32.mrb[0].mxu0
        %v1648 = vadd.f32 %v1605, %v1647
        %v1649 = vpop.f32.mrb[0].mxu0
        %v1650 = vadd.f32 %v1607, %v1649
        %v1651 = vpop.f32.mrb[0].mxu0
        %v1652 = vadd.f32 %v1609, %v1651
        %v1653 = vpop.f32.mrb[0].mxu0
        %v1654 = vadd.f32 %v1611, %v1653
        %1655 = vdwg.mxu0
        %v1656 = vld [vmem:[%s4] sm:$0xf]
        %v1658 = vlaneseq
        %v1659 = vshrl.u32 %v1658, 7
        %v1660 = vsub.s32 0, %v1659
        %v1661 = vrot.slane %v1656, %v1660
        %v1662 = vlaneseq
        %v1663 = vshrl.u32 %v1662, 7
        %v1664 = vsub.s32 1, %v1663
        %v1665 = vrot.slane %v1656, %v1664
        %v1666 = vlaneseq
        %v1667 = vshrl.u32 %v1666, 7
        %v1668 = vsub.s32 2, %v1667
        %v1669 = vrot.slane %v1656, %v1668
        %v1670 = vlaneseq
        %v1671 = vshrl.u32 %v1670, 7
        %v1672 = vsub.s32 3, %v1671
        %v1673 = vrot.slane %v1656, %v1672
        %v1678 = vadd.f32 %v1562, %v1661
        %v1679 = vadd.f32 %v1564, %v1665
        %v1680 = vadd.f32 %v1648, %v1669
        %v1681 = vadd.f32 %v1650, %v1673
        %v1682 = vadd.f32 %v1566, %v1661
        %v1683 = vadd.f32 %v1568, %v1665
        %v1684 = vadd.f32 %v1652, %v1669
        %v1685 = vadd.f32 %v1654, %v1673
        %v1686 = vpack.c.bf16 %v1682, %v1678
        %v1687 = vpack.c.bf16 %v1683, %v1679
        %v1688 = vpack.c.bf16 %v1684, %v1680
        %v1689 = vpack.c.bf16 %v1685, %v1681
        %v1690 = vtanh.bf16.pop %v1686
        %v1691 = vtanh.bf16.pop %v1687
        %v1692 = vtanh.bf16.pop %v1688
        %v1693 = vtanh.bf16.pop %v1689
        %v1694 = vld [vmem:[#allocation10] sm:$0xf]
        %v1695 = vld [vmem:[#allocation10 + $0x4] sm:$0xf]
        %v1696 = vld [vmem:[#allocation10 + $0x8] sm:$0xf]
        %v1697 = vld [vmem:[#allocation10 + $0xc] sm:$0xf]
        %v1698 = vld [vmem:[#allocation10 + $0x10] sm:$0xf]
        %v1699 = vld [vmem:[#allocation10 + $0x14] sm:$0xf]
        %v1700 = vld [vmem:[#allocation10 + $0x18] sm:$0xf]
        %v1701 = vld [vmem:[#allocation10 + $0x1c] sm:$0xf]
        %v1702 = vld [vmem:[#allocation10 + $0x20] sm:$0xf]
        %v1703 = vld [vmem:[#allocation10 + $0x24] sm:$0xf]
        %v1704 = vld [vmem:[#allocation10 + $0x28] sm:$0xf]
        %v1705 = vld [vmem:[#allocation10 + $0x2c] sm:$0xf]
        %v1706 = vld [vmem:[#allocation10 + $0x30] sm:$0xf]
        %v1707 = vld [vmem:[#allocation10 + $0x34] sm:$0xf]
        %v1708 = vld [vmem:[#allocation10 + $0x38] sm:$0xf]
        %v1709 = vld [vmem:[#allocation10 + $0x3c] sm:$0xf]
        %v1710 = vld [vmem:[#allocation10 + $0x40] sm:$0xf]
        %v1711 = vld [vmem:[#allocation10 + $0x44] sm:$0xf]
        %v1712 = vld [vmem:[#allocation10 + $0x48] sm:$0xf]
        %v1713 = vld [vmem:[#allocation10 + $0x4c] sm:$0xf]
        %v1714 = vld [vmem:[#allocation10 + $0x50] sm:$0xf]
        %v1715 = vld [vmem:[#allocation10 + $0x54] sm:$0xf]
        %v1716 = vld [vmem:[#allocation10 + $0x58] sm:$0xf]
        %v1717 = vld [vmem:[#allocation10 + $0x5c] sm:$0xf]
        %v1718 = vld [vmem:[#allocation10 + $0x60] sm:$0xf]
        %v1719 = vld [vmem:[#allocation10 + $0x64] sm:$0xf]
        %v1720 = vld [vmem:[#allocation10 + $0x68] sm:$0xf]
        %v1721 = vld [vmem:[#allocation10 + $0x6c] sm:$0xf]
        %v1722 = vld [vmem:[#allocation10 + $0x70] sm:$0xf]
        %v1723 = vld [vmem:[#allocation10 + $0x74] sm:$0xf]
        %v1724 = vld [vmem:[#allocation10 + $0x78] sm:$0xf]
        %v1725 = vld [vmem:[#allocation10 + $0x7c] sm:$0xf]
        %v1726 = vld [vmem:[#allocation10 + $0x80] sm:$0xf]
        %v1727 = vld [vmem:[#allocation10 + $0x84] sm:$0xf]
        %v1728 = vld [vmem:[#allocation10 + $0x88] sm:$0xf]
        %v1729 = vld [vmem:[#allocation10 + $0x8c] sm:$0xf]
        %v1730 = vld [vmem:[#allocation10 + $0x90] sm:$0xf]
        %v1731 = vld [vmem:[#allocation10 + $0x94] sm:$0xf]
        %v1732 = vld [vmem:[#allocation10 + $0x98] sm:$0xf]
        %v1733 = vld [vmem:[#allocation10 + $0x9c] sm:$0xf]
        %v1734 = vld [vmem:[#allocation10 + $0xa0] sm:$0xf]
        %v1735 = vld [vmem:[#allocation10 + $0xa4] sm:$0xf]
        %v1736 = vld [vmem:[#allocation10 + $0xa8] sm:$0xf]
        %v1737 = vld [vmem:[#allocation10 + $0xac] sm:$0xf]
        %v1738 = vld [vmem:[#allocation10 + $0xb0] sm:$0xf]
        %v1739 = vld [vmem:[#allocation10 + $0xb4] sm:$0xf]
        %v1740 = vld [vmem:[#allocation10 + $0xb8] sm:$0xf]
        %v1741 = vld [vmem:[#allocation10 + $0xbc] sm:$0xf]
        %v1742 = vld [vmem:[#allocation10 + $0xc0] sm:$0xf]
        %v1743 = vld [vmem:[#allocation10 + $0xc4] sm:$0xf]
        %v1744 = vld [vmem:[#allocation10 + $0xc8] sm:$0xf]
        %v1745 = vld [vmem:[#allocation10 + $0xcc] sm:$0xf]
        %v1746 = vld [vmem:[#allocation10 + $0xd0] sm:$0xf]
        %v1747 = vld [vmem:[#allocation10 + $0xd4] sm:$0xf]
        %v1748 = vld [vmem:[#allocation10 + $0xd8] sm:$0xf]
        %v1749 = vld [vmem:[#allocation10 + $0xdc] sm:$0xf]
        %v1750 = vld [vmem:[#allocation10 + $0xe0] sm:$0xf]
        %v1751 = vld [vmem:[#allocation10 + $0xe4] sm:$0xf]
        %v1752 = vld [vmem:[#allocation10 + $0xe8] sm:$0xf]
        %v1753 = vld [vmem:[#allocation10 + $0xec] sm:$0xf]
        %v1754 = vld [vmem:[#allocation10 + $0xf0] sm:$0xf]
        %v1755 = vld [vmem:[#allocation10 + $0xf4] sm:$0xf]
        %v1756 = vld [vmem:[#allocation10 + $0xf8] sm:$0xf]
        %v1757 = vld [vmem:[#allocation10 + $0xfc] sm:$0xf]
        %v1822 = vunpack.c.l.b16 %v1694
        %v1823 = vunpack.c.l.b16 %v1695
        %v1824 = vunpack.c.l.b16 %v1696
        %v1825 = vunpack.c.l.b16 %v1697
        %v1826 = vunpack.c.l.b16 %v1698
        %v1827 = vunpack.c.l.b16 %v1699
        %v1828 = vunpack.c.l.b16 %v1700
        %v1829 = vunpack.c.l.b16 %v1701
        %v1830 = vunpack.c.l.b16 %v1702
        %v1831 = vunpack.c.l.b16 %v1703
        %v1832 = vunpack.c.l.b16 %v1704
        %v1833 = vunpack.c.l.b16 %v1705
        %v1834 = vunpack.c.l.b16 %v1706
        %v1835 = vunpack.c.l.b16 %v1707
        %v1836 = vunpack.c.l.b16 %v1708
        %v1837 = vunpack.c.l.b16 %v1709
        %v1838 = vunpack.c.l.b16 %v1710
        %v1839 = vunpack.c.l.b16 %v1711
        %v1840 = vunpack.c.l.b16 %v1712
        %v1841 = vunpack.c.l.b16 %v1713
        %v1842 = vunpack.c.l.b16 %v1714
        %v1843 = vunpack.c.l.b16 %v1715
        %v1844 = vunpack.c.l.b16 %v1716
        %v1845 = vunpack.c.l.b16 %v1717
        %v1846 = vunpack.c.l.b16 %v1718
        %v1847 = vunpack.c.l.b16 %v1719
        %v1848 = vunpack.c.l.b16 %v1720
        %v1849 = vunpack.c.l.b16 %v1721
        %v1850 = vunpack.c.l.b16 %v1722
        %v1851 = vunpack.c.l.b16 %v1723
        %v1852 = vunpack.c.l.b16 %v1724
        %v1853 = vunpack.c.l.b16 %v1725
        %v1854 = vunpack.c.l.b16 %v1726
        %v1855 = vunpack.c.l.b16 %v1727
        %v1856 = vunpack.c.l.b16 %v1728
        %v1857 = vunpack.c.l.b16 %v1729
        %v1858 = vunpack.c.l.b16 %v1730
        %v1859 = vunpack.c.l.b16 %v1731
        %v1860 = vunpack.c.l.b16 %v1732
        %v1861 = vunpack.c.l.b16 %v1733
        %v1862 = vunpack.c.l.b16 %v1734
        %v1863 = vunpack.c.l.b16 %v1735
        %v1864 = vunpack.c.l.b16 %v1736
        %v1865 = vunpack.c.l.b16 %v1737
        %v1866 = vunpack.c.l.b16 %v1738
        %v1867 = vunpack.c.l.b16 %v1739
        %v1868 = vunpack.c.l.b16 %v1740
        %v1869 = vunpack.c.l.b16 %v1741
        %v1870 = vunpack.c.l.b16 %v1742
        %v1871 = vunpack.c.l.b16 %v1743
        %v1872 = vunpack.c.l.b16 %v1744
        %v1873 = vunpack.c.l.b16 %v1745
        %v1874 = vunpack.c.l.b16 %v1746
        %v1875 = vunpack.c.l.b16 %v1747
        %v1876 = vunpack.c.l.b16 %v1748
        %v1877 = vunpack.c.l.b16 %v1749
        %v1878 = vunpack.c.l.b16 %v1750
        %v1879 = vunpack.c.l.b16 %v1751
        %v1880 = vunpack.c.l.b16 %v1752
        %v1881 = vunpack.c.l.b16 %v1753
        %v1882 = vunpack.c.l.b16 %v1754
        %v1883 = vunpack.c.l.b16 %v1755
        %v1884 = vunpack.c.l.b16 %v1756
        %v1885 = vunpack.c.l.b16 %v1757
        %v1886 = vpack.c.b16 %v1823, %v1822
        %v1887 = vpack.c.b16 %v1825, %v1824
        %v1888 = vpack.c.b16 %v1827, %v1826
        %v1889 = vpack.c.b16 %v1829, %v1828
        %v1890 = vpack.c.b16 %v1831, %v1830
        %v1891 = vpack.c.b16 %v1833, %v1832
        %v1892 = vpack.c.b16 %v1835, %v1834
        %v1893 = vpack.c.b16 %v1837, %v1836
        %v1894 = vpack.c.b16 %v1839, %v1838
        %v1895 = vpack.c.b16 %v1841, %v1840
        %v1896 = vpack.c.b16 %v1843, %v1842
        %v1897 = vpack.c.b16 %v1845, %v1844
        %v1898 = vpack.c.b16 %v1847, %v1846
        %v1899 = vpack.c.b16 %v1849, %v1848
        %v1900 = vpack.c.b16 %v1851, %v1850
        %v1901 = vpack.c.b16 %v1853, %v1852
        %v1902 = vpack.c.b16 %v1855, %v1854
        %v1903 = vpack.c.b16 %v1857, %v1856
        %v1904 = vpack.c.b16 %v1859, %v1858
        %v1905 = vpack.c.b16 %v1861, %v1860
        %v1906 = vpack.c.b16 %v1863, %v1862
        %v1907 = vpack.c.b16 %v1865, %v1864
        %v1908 = vpack.c.b16 %v1867, %v1866
        %v1909 = vpack.c.b16 %v1869, %v1868
        %v1910 = vpack.c.b16 %v1871, %v1870
        %v1911 = vpack.c.b16 %v1873, %v1872
        %v1912 = vpack.c.b16 %v1875, %v1874
        %v1913 = vpack.c.b16 %v1877, %v1876
        %v1914 = vpack.c.b16 %v1879, %v1878
        %v1915 = vpack.c.b16 %v1881, %v1880
        %v1916 = vpack.c.b16 %v1883, %v1882
        %v1917 = vpack.c.b16 %v1885, %v1884
        %1950 = vmatprep.subr.bf16.mxu0 0
        %1951 = vmatpush1.bf16.msra.mxu0 %v1886
        %1952 = vmatprep.subr.bf16.mxu0 0
        %1953 = vmatpush1.bf16.msra.mxu0 %v1887
        %1954 = vmatprep.subr.bf16.mxu0 0
        %1955 = vmatpush1.bf16.msra.mxu0 %v1888
        %1956 = vmatprep.subr.bf16.mxu0 0
        %1957 = vmatpush1.bf16.msra.mxu0 %v1889
        %1958 = vmatprep.subr.bf16.mxu0 0
        %1959 = vmatpush1.bf16.msra.mxu0 %v1890
        %1960 = vmatprep.subr.bf16.mxu0 0
        %1961 = vmatpush1.bf16.msra.mxu0 %v1891
        %1962 = vmatprep.subr.bf16.mxu0 0
        %1963 = vmatpush1.bf16.msra.mxu0 %v1892
        %1964 = vmatprep.subr.bf16.mxu0 0
        %1965 = vmatpush1.bf16.msra.mxu0 %v1893
        %1966 = vmatprep.subr.bf16.mxu0 0
        %1967 = vmatpush1.bf16.msra.mxu0 %v1894
        %1968 = vmatprep.subr.bf16.mxu0 0
        %1969 = vmatpush1.bf16.msra.mxu0 %v1895
        %1970 = vmatprep.subr.bf16.mxu0 0
        %1971 = vmatpush1.bf16.msra.mxu0 %v1896
        %1972 = vmatprep.subr.bf16.mxu0 0
        %1973 = vmatpush1.bf16.msra.mxu0 %v1897
        %1974 = vmatprep.subr.bf16.mxu0 0
        %1975 = vmatpush1.bf16.msra.mxu0 %v1898
        %1976 = vmatprep.subr.bf16.mxu0 0
        %1977 = vmatpush1.bf16.msra.mxu0 %v1899
        %1978 = vmatprep.subr.bf16.mxu0 0
        %1979 = vmatpush1.bf16.msra.mxu0 %v1900
        %1980 = vmatprep.subr.bf16.mxu0 0
        %1981 = vmatpush1.bf16.msra.mxu0 %v1901
        %1982 = vmatprep.mubr.bf16.mxu0 %v1691
        %1983 = vmatmul.mubr.bf16.gmra.mrb[0].mxu0 %v1690
        %v1984 = vpop.f32.mrb[0].mxu0
        %v1985 = vadd.f32 0.0, %v1984
        %v1986 = vpop.f32.mrb[0].mxu0
        %v1987 = vpop.f32.mrb[0].mxu0
        %v1988 = vadd.f32 0.0, %v1987
        %v1989 = vpop.f32.mrb[0].mxu0
        %1990 = vdwg.mxu0
        %1991 = vmatprep.subr.bf16.mxu0 0
        %1992 = vmatpush1.bf16.msra.mxu0 %v1902
        %1993 = vmatprep.subr.bf16.mxu0 0
        %1994 = vmatpush1.bf16.msra.mxu0 %v1903
        %1995 = vmatprep.subr.bf16.mxu0 0
        %1996 = vmatpush1.bf16.msra.mxu0 %v1904
        %1997 = vmatprep.subr.bf16.mxu0 0
        %1998 = vmatpush1.bf16.msra.mxu0 %v1905
        %1999 = vmatprep.subr.bf16.mxu0 0
        %2000 = vmatpush1.bf16.msra.mxu0 %v1906
        %2001 = vmatprep.subr.bf16.mxu0 0
        %2002 = vmatpush1.bf16.msra.mxu0 %v1907
        %2003 = vmatprep.subr.bf16.mxu0 0
        %2004 = vmatpush1.bf16.msra.mxu0 %v1908
        %2005 = vmatprep.subr.bf16.mxu0 0
        %2006 = vmatpush1.bf16.msra.mxu0 %v1909
        %2007 = vmatprep.subr.bf16.mxu0 0
        %2008 = vmatpush1.bf16.msra.mxu0 %v1910
        %2009 = vmatprep.subr.bf16.mxu0 0
        %2010 = vmatpush1.bf16.msra.mxu0 %v1911
        %2011 = vmatprep.subr.bf16.mxu0 0
        %2012 = vmatpush1.bf16.msra.mxu0 %v1912
        %2013 = vmatprep.subr.bf16.mxu0 0
        %2014 = vmatpush1.bf16.msra.mxu0 %v1913
        %2015 = vmatprep.subr.bf16.mxu0 0
        %2016 = vmatpush1.bf16.msra.mxu0 %v1914
        %2017 = vmatprep.subr.bf16.mxu0 0
        %2018 = vmatpush1.bf16.msra.mxu0 %v1915
        %2019 = vmatprep.subr.bf16.mxu0 0
        %2020 = vmatpush1.bf16.msra.mxu0 %v1916
        %2021 = vmatprep.subr.bf16.mxu0 0
        %2022 = vmatpush1.bf16.msra.mxu0 %v1917
        %2023 = vmatprep.mubr.bf16.mxu0 %v1693
        %2024 = vmatmul.mubr.bf16.gmra.mrb[0].mxu0 %v1692
        %v2025 = vpop.f32.mrb[0].mxu0
        %v2026 = vadd.f32 %v1985, %v2025
        %v2027 = vpop.f32.mrb[0].mxu0
        %v2028 = vpop.f32.mrb[0].mxu0
        %v2029 = vadd.f32 %v1988, %v2028
        %v2030 = vpop.f32.mrb[0].mxu0
        %2031 = vdwg.mxu0
        %2032 = vst [vmem:[%s354] sm:$0xff] %v2026
        %2033 = vst [vmem:[%s354 + $0x8] sm:$0xff] %v2029
        %s2034 = sand.u32 %s171, 1
        %s2035 = scalar_lea.sflag [#allocation4], %s2034
        %s2036 = sand.u32 %s171, 1
        %s2037 = smul.addr %s2036, 16
        %s2038 = scalar_lea.vmem [#allocation11], %s2037
        // Predicated region
        $region65: #{tpu_custom_call.1} parent=43 // pred_check
          %p2039 = pneg %p181
        $region66: #{tpu_custom_call.1} parent=43 // pred_check_branch
          %2041 = sbr.rel (%p2039) target = $region68
        $region67: #{tpu_custom_call.1} parent=43 // pred_region
          %s2042 = smul.u32 2, %s27
          %s2044 = ssub.s32 256, 256
          %2045 = vsyncadd %s2035, %s2044
          %s2046 = smul.addr %s2042, 128
          %s2047 = scalar_lea.hbm %s6, %s2046
          %s2048 = sshll.u32 %s2038, 4
          %s2049 = int_to_ptr.vmem [resolvable:$true] %s2048
          %2054 = dma.vmem_to_hbm [thread:$0]  %s2049, 256, %s2047, %s2035, 128, 128, 8
        $region68: #{tpu_custom_call.1} parent=43 // pred_fallthru
          _
      $region44: #{tpu_custom_call.1} parent=5 // pred_fallthru
        _
      %p2055 = scmp.le.s32.totalorder 2, %s22
      // Predicated region
      $region69: #{tpu_custom_call.1} parent=5 // pred_check
        %p2056 = pneg %p2055
      $region70: #{tpu_custom_call.1} parent=5 // pred_check_branch
        %2058 = sbr.rel (%p2056) target = $region72
      $region71: #{tpu_custom_call.1} parent=5 // pred_region
        %s2059 = ssub.s32 %s22, 2
        // Predicated region
        $region73: #{tpu_custom_call.1} parent=71 // pred_check
          %p2060 = pneg %p187
        $region74: #{tpu_custom_call.1} parent=71 // pred_check_branch
          %2062 = sbr.rel (%p2060) target = $region76
        $region75: #{tpu_custom_call.1} parent=71 // pred_region
          %s2063 = sand.u32 %s172, 1
          %s2064 = scalar_lea.sflag [#allocation4], %s2063
          %s2065 = sand.u32 %s172, 1
          %s2066 = smul.addr %s2065, 16
          %s2067 = scalar_lea.vmem [#allocation11], %s2066
          %2068 = dma.done %s2064, 256
        $region76: #{tpu_custom_call.1} parent=71 // pred_fallthru
          _
      $region72: #{tpu_custom_call.1} parent=5 // pred_fallthru
        _
    $region6: #{tpu_custom_call.1} parent=1 // loop_footer
      %s26 = sadd.s32 1, %s22
    $region7: #{tpu_custom_call.1} parent=1 // loop_footer_branch
      %21 = sbr.rel target = $region3
    $region8: #{tpu_custom_call.1} parent=1 // loop_exit
      _
    %2069 = vsyncpa [#allocation3], 1
    %s2070 = scalar_lea.sflag [#allocation3], 1
    %2071 = vsyncpa %s2070, 1
    %2072 = vsyncpa [#allocation6], 1
    %s2073 = scalar_lea.sflag [#allocation6], 1
    %2074 = vsyncpa %s2073, 1
    %2075 = vsyncpa [#allocation9], 1
    %2076 = vsyncpa [#allocation4], 1
    %s2077 = scalar_lea.sflag [#allocation4], 1
    %2078 = vsyncpa %s2077, 1

</llo_original>
